<compile_context>
chip_gen: v6e
topology: v6e:2x2x1
jax: 0.10.0
libtpu: 0.0.40
codegen_flags: <defaults>
</compile_context>

<pallas_src>
import functools

import jax
import jax.numpy as jnp
from jax import lax
from jax.experimental import pallas as pl
from jax.experimental.pallas import tpu as pltpu


# ----------------------------------------------------------------------------
# Per-generation tiling constants
# ----------------------------------------------------------------------------

def _round_up(x, m):
    return (x + m - 1) // m * m


def _cpad(c):
    return _round_up(c, 128)


def _vmem_capacity_bytes():
    try:
        return int(pltpu.get_tpu_info().vmem_capacity_bytes)
    except Exception:
        return 64 * 1024 * 1024  # conservative fallback (v7x-sized)


_VMEM_BYTES = _vmem_capacity_bytes()
# Worst-case resident set for matmul_affine at TM_MAX (acc + 2x{x,w,out,res})
# is ~16 MiB with TM=1024, TN<=1024, TK<=512 -- comfortably under the limits below.
_TM_MAX = 1024 if _VMEM_BYTES >= (96 << 20) else 512   # bigger M tiles on 128MiB parts
_VMEM_LIMIT = min(_VMEM_BYTES // 2, 64 << 20)

_STEM_K = 128   # stem im2col contraction dim (27) zero-padded to a full lane group


def _cparams(sem):
    return pltpu.CompilerParams(dimension_semantics=sem,
                                vmem_limit_bytes=_VMEM_LIMIT)


# ----------------------------------------------------------------------------
# Kernel 1: tiled matmul + BN affine + optional residual + optional ReLU
# ----------------------------------------------------------------------------

def _mm_affine_nk1_kernel(*refs, relu, has_res):
    """Single-K-block matmul: no scratch accumulator, no reduction loop."""
    if has_res:
        x_ref, w_ref, s_ref, b_ref, r_ref, o_ref = refs
    else:
        x_ref, w_ref, s_ref, b_ref, o_ref = refs
        r_ref = None
    y = jnp.dot(x_ref[...], w_ref[...], preferred_element_type=jnp.float32)
    y = y * s_ref[...] + b_ref[...]
    if has_res:
        y = y + r_ref[...].astype(jnp.float32)
    if relu:
        y = jnp.maximum(y, 0.0)
    o_ref[...] = y.astype(o_ref.dtype)


def _mm_affine_kernel(*refs, relu, has_res, nk):
    """Multi-K-block matmul with a VMEM f32 accumulator (grid = (nm, nn, nk))."""
    if has_res:
        x_ref, w_ref, s_ref, b_ref, r_ref, o_ref, acc_ref = refs
    else:
        x_ref, w_ref, s_ref, b_ref, o_ref, acc_ref = refs
        r_ref = None
    k = pl.program_id(2)

    @pl.when(k == 0)
    def _():
        acc_ref[...] = jnp.zeros_like(acc_ref)

    acc_ref[...] += jnp.dot(x_ref[...], w_ref[...],
                            preferred_element_type=jnp.float32)

    @pl.when(k == nk - 1)
    def _():
        y = acc_ref[...] * s_ref[...] + b_ref[...]
        if has_res:
            y = y + r_ref[...].astype(jnp.float32)
        if relu:
            y = jnp.maximum(y, 0.0)
        o_ref[...] = y.astype(o_ref.dtype)


def matmul_affine(x, w, scale, shift, residual=None, relu=False,
                  out_dtype=jnp.bfloat16):
    """y = maybe_relu((x @ w) * scale + shift [+ residual]); tiled over M/N (and K)."""
    M, K = x.shape
    Kw, Nn = w.shape
    assert K == Kw and Nn % 128 == 0

    x = x.astype(jnp.bfloat16)
    w = w.astype(jnp.bfloat16)
    scale2 = jnp.asarray(scale, jnp.float32).reshape(1, Nn)
    shift2 = jnp.asarray(shift, jnp.float32).reshape(1, Nn)

    # --- M tiling: cdiv-based so padding is at most ~15 rows per tile; keep at
    # least two M tiles when M is large enough so v7x megacore has work per core.
    nm = int(pl.cdiv(M, _TM_MAX))
    if M >= 256:
        nm = max(nm, 2)
    TM = _round_up(int(pl.cdiv(M, nm)), 16)
    Mp = nm * TM
    if Mp != M:
        x = jnp.pad(x, ((0, Mp - M), (0, 0)))

    # --- N (Cout) tiling only for very wide outputs.
    if Nn >= 2048 and Nn % 1024 == 0:
        TN = 1024
    else:
        TN = Nn
    nn = Nn // TN

    # --- K tiling (reduction axis, innermost) only when K is large.
    if K > 1024:
        TK = 512
        Kp = _round_up(K, TK)
        if Kp != K:
            x = jnp.pad(x, ((0, 0), (0, Kp - K)))
            w = jnp.pad(w, ((0, Kp - K), (0, 0)))
    else:
        TK, Kp = K, K
    nk = Kp // TK

    has_res = residual is not None
    if has_res:
        r = residual.astype(jnp.bfloat16)
        if Mp != M:
            r = jnp.pad(r, ((0, Mp - M), (0, 0)))

    if nk == 1:
        ins = [x, w, scale2, shift2]
        in_specs = [
            pl.BlockSpec((TM, TK), lambda i, j: (i, 0)),
            pl.BlockSpec((TK, TN), lambda i, j: (0, j)),
            pl.BlockSpec((1, TN), lambda i, j: (0, j)),
            pl.BlockSpec((1, TN), lambda i, j: (0, j)),
        ]
        if has_res:
            ins.append(r)
            in_specs.append(pl.BlockSpec((TM, TN), lambda i, j: (i, j)))
        out = pl.pallas_call(
            functools.partial(_mm_affine_nk1_kernel, relu=relu, has_res=has_res),
            out_shape=jax.ShapeDtypeStruct((Mp, Nn), out_dtype),
            grid=(nm, nn),
            in_specs=in_specs,
            out_specs=pl.BlockSpec((TM, TN), lambda i, j: (i, j)),
            compiler_params=_cparams(("parallel", "parallel")),
        )(*ins)
    else:
        ins = [x, w, scale2, shift2]
        in_specs = [
            pl.BlockSpec((TM, TK), lambda i, j, k: (i, k)),
            pl.BlockSpec((TK, TN), lambda i, j, k: (k, j)),
            pl.BlockSpec((1, TN), lambda i, j, k: (0, j)),
            pl.BlockSpec((1, TN), lambda i, j, k: (0, j)),
        ]
        if has_res:
            ins.append(r)
            in_specs.append(pl.BlockSpec((TM, TN), lambda i, j, k: (i, j)))
        out = pl.pallas_call(
            functools.partial(_mm_affine_kernel, relu=relu, has_res=has_res, nk=nk),
            out_shape=jax.ShapeDtypeStruct((Mp, Nn), out_dtype),
            grid=(nm, nn, nk),
            in_specs=in_specs,
            out_specs=pl.BlockSpec((TM, TN), lambda i, j, k: (i, j)),
            scratch_shapes=[pltpu.VMEM((TM, TN), jnp.float32)],
            compiler_params=_cparams(("parallel", "parallel", "arbitrary")),
        )(*ins)

    if Mp != M:
        out = out[:M]
    return out


# ----------------------------------------------------------------------------
# Kernel 2: fused stride-1 3x3 conv + BN affine + ReLU (+ optional fused 2x2 avgpool)
# ----------------------------------------------------------------------------

def _conv3x3_kernel(*refs, H, W, relu, pool):
    if pool:
        x_ref, w_ref, s_ref, b_ref, p_ref, o_ref = refs
    else:
        x_ref, w_ref, s_ref, b_ref, o_ref = refs
        p_ref = None
    HW = H * W
    Cin = x_ref.shape[-1]
    Cout = w_ref.shape[-1]

    x = x_ref[0]                                         # (HW, Cin) bf16

    # Boundary masks built once per grid step (hoisted out of the tap loop):
    # pre-mask the image instead of masking every shifted slice.
    iota = lax.broadcasted_iota(jnp.int32, (HW, Cin), 0)
    if (W & (W - 1)) == 0:
        col = jnp.bitwise_and(iota, W - 1)               # pixel column index
    else:
        col = jnp.mod(iota, W)
    zero = jnp.zeros_like(x)
    x_c0 = jnp.where(col != 0, x, zero)                  # column 0 zeroed  (dw == +1 taps)
    x_cl = jnp.where(col != W - 1, x, zero)              # column W-1 zeroed (dw == -1 taps)

    zpad = jnp.zeros((W + 1, Cin), x.dtype)
    xp = jnp.concatenate([zpad, x, zpad], axis=0)        # dw == 0
    xp_c0 = jnp.concatenate([zpad, x_c0, zpad], axis=0)  # dw == +1
    xp_cl = jnp.concatenate([zpad, x_cl, zpad], axis=0)  # dw == -1

    acc = jnp.zeros((HW, Cout), jnp.float32)
    tap = 0
    for dh in (-1, 0, 1):
        for dw in (-1, 0, 1):
            src = xp_c0 if dw == 1 else (xp_cl if dw == -1 else xp)
            start = (W + 1) + dh * W + dw
            xs = lax.slice(src, (start, 0), (start + HW, Cin))
            acc = acc + jnp.dot(xs, w_ref[tap],
                                preferred_element_type=jnp.float32)
            tap += 1

    y = acc * s_ref[...] + b_ref[...]
    if relu:
        y = jnp.maximum(y, 0.0)
    if pool:
        # fused 2x2 average pool via an MXU dot with a 0.25-valued pooling matrix
        o_ref[0] = jnp.dot(p_ref[...], y.astype(jnp.bfloat16),
                           preferred_element_type=jnp.float32).astype(o_ref.dtype)
    else:
        o_ref[0] = y.astype(o_ref.dtype)


def _pool_matrix(H, W, dtype=jnp.bfloat16):
    """(HW//4, HW) matrix: row o has 0.25 at the four pixels pooled into output o."""
    HW = H * W
    HW4 = (H // 2) * (W // 2)
    p = jnp.arange(HW)
    parent = (p // W) // 2 * (W // 2) + (p % W) // 2
    P = (jnp.arange(HW4)[:, None] == parent[None, :]).astype(jnp.float32) * 0.25
    return P.astype(dtype)


def conv3x3_bn(x, w_taps, scale, shift, relu=True, pool=False):
    """x: (N, H, W, Cin) bf16, w_taps: (9, Cin, Cout). Stride-1, padding-1.
    If pool=True the following 2x2 average pool is fused into the epilogue."""
    N, H, W, Cin = x.shape
    Cout = w_taps.shape[-1]
    xr = x.reshape(N, H * W, Cin).astype(jnp.bfloat16)

    ins = [xr, w_taps.astype(jnp.bfloat16),
           jnp.asarray(scale, jnp.float32).reshape(1, Cout),
           jnp.asarray(shift, jnp.float32).reshape(1, Cout)]
    in_specs = [
        pl.BlockSpec((1, H * W, Cin), lambda i: (i, 0, 0)),
        pl.BlockSpec((9, Cin, Cout), lambda i: (0, 0, 0)),
        pl.BlockSpec((1, Cout), lambda i: (0, 0)),
        pl.BlockSpec((1, Cout), lambda i: (0, 0)),
    ]
    if pool:
        Ho, Wo = H // 2, W // 2
        out_rows = Ho * Wo
        ins.append(_pool_matrix(H, W))
        in_specs.append(pl.BlockSpec((out_rows, H * W), lambda i: (0, 0)))
    else:
        Ho, Wo = H, W
        out_rows = H * W

    out = pl.pallas_call(
        functools.partial(_conv3x3_kernel, H=H, W=W, relu=relu, pool=pool),
        out_shape=jax.ShapeDtypeStruct((N, out_rows, Cout), jnp.bfloat16),
        grid=(N,),
        in_specs=in_specs,
        out_specs=pl.BlockSpec((1, out_rows, Cout), lambda i: (i, 0, 0)),
        compiler_params=_cparams(("parallel",)),
    )(*ins)
    return out.reshape(N, Ho, Wo, Cout)


# ----------------------------------------------------------------------------
# Kernel 3: standalone 2x2 average pool (identity / downsample paths only)
# ----------------------------------------------------------------------------

def _avgpool_kernel(x_ref, o_ref):
    C = o_ref.shape[-1]
    xb = x_ref[...]                                      # (TR, 2, Wh, 2C)
    rows = xb[:, 0].astype(jnp.float32) + xb[:, 1].astype(jnp.float32)
    pooled = (rows[:, :, :C] + rows[:, :, C:]) * 0.25
    o_ref[...] = pooled.astype(o_ref.dtype)


def avgpool2x2(x):
    N, H, W, C = x.shape
    NH2, Wh = N * H // 2, W // 2
    xr = x.reshape(NH2, 2, Wh, 2 * C)                    # free row-major reshape

    # cdiv-based row tiling (target >= 256 rows/block; >=2 blocks for v7x megacore)
    nb = int(pl.cdiv(NH2, 256))
    if NH2 >= 16:
        nb = max(nb, 2)
    TR = int(pl.cdiv(NH2, nb))
    NH2p = nb * TR
    if NH2p != NH2:
        xr = jnp.pad(xr, ((0, NH2p - NH2), (0, 0), (0, 0), (0, 0)))

    out = pl.pallas_call(
        _avgpool_kernel,
        out_shape=jax.ShapeDtypeStruct((NH2p, Wh, C), x.dtype),
        grid=(nb,),
        in_specs=[pl.BlockSpec((TR, 2, Wh, 2 * C), lambda i: (i, 0, 0, 0))],
        out_specs=pl.BlockSpec((TR, Wh, C), lambda i: (i, 0, 0)),
        compiler_params=_cparams(("parallel",)),
    )(xr)
    if NH2p != NH2:
        out = out[:NH2]
    return out.reshape(N, H // 2, Wh, C)


# ----------------------------------------------------------------------------
# Kernel 4: fused QKV attention pool (one kernel per batch element)
# ----------------------------------------------------------------------------

def _attnpool_kernel(x_ref, pos_ref, wqkv_ref, bqkv_ref, wc_ref, bc_ref,
                     sel_ref, selt_ref, o_ref, *, scale, C):
    xm = x_ref[0].astype(jnp.float32)                            # (L, C)
    mean = jnp.mean(xm, axis=0, keepdims=True)                   # (1, C)
    tok = jnp.concatenate([mean, xm], axis=0) + pos_ref[...]     # (L+1, C)
    tok_b = tok.astype(jnp.bfloat16)

    # single fused QKV projection, then lane-aligned slices (C is a multiple of 128)
    qkv = jnp.dot(tok_b, wqkv_ref[...],
                  preferred_element_type=jnp.float32) + bqkv_ref[...]   # (L+1, 3C)
    q = qkv[0:1, 0:C]                                            # query = mean token only
    k = qkv[:, C:2 * C]
    v = qkv[:, 2 * C:3 * C]

    # per-head scores via lane-group reduction with an exact 0/1 bf16 selector.
    # NOTE: softmax runs over all 128 padded head columns; padded heads give a
    # uniform column that the zero rows of selt eliminate, so the result is exact.
    prod = ((q * scale) * k).astype(jnp.bfloat16)                # (L+1, C)
    s = jnp.dot(prod, sel_ref[...],
                preferred_element_type=jnp.float32)              # (L+1, HP)
    s = s - jnp.max(s, axis=0, keepdims=True)
    p = jnp.exp(s)
    p = p * pl.reciprocal(jnp.sum(p, axis=0, keepdims=True), approx=True)

    pe = jnp.dot(p.astype(jnp.bfloat16), selt_ref[...],
                 preferred_element_type=jnp.float32)             # (L+1, C)
    attn = jnp.sum(pe * v, axis=0, keepdims=True)                # (1, C)

    y = jnp.dot(attn.astype(jnp.bfloat16), wc_ref[...],
                preferred_element_type=jnp.float32) + bc_ref[...]  # (1, Dp)
    o_ref[0] = y.astype(o_ref.dtype)


def attnpool_forward(x, ap, output_dim):
    N, H, W, C = x.shape
    L = H * W
    Lp1 = L + 1
    Dp = ap["wc"].shape[1]
    HP = ap["sel"].shape[1]
    xr = x.reshape(N, L, C).astype(jnp.bfloat16)
    scale = float(ap["dh"]) ** -0.5

    out = pl.pallas_call(
        functools.partial(_attnpool_kernel, scale=scale, C=C),
        out_shape=jax.ShapeDtypeStruct((N, 1, Dp), jnp.float32),
        grid=(N,),
        in_specs=[
            pl.BlockSpec((1, L, C), lambda i: (i, 0, 0)),
            pl.BlockSpec((Lp1, C), lambda i: (0, 0)),
            pl.BlockSpec((C, 3 * C), lambda i: (0, 0)),   # fused wq|wk|wv
            pl.BlockSpec((1, 3 * C), lambda i: (0, 0)),   # fused bq|bk|bv
            pl.BlockSpec((C, Dp), lambda i: (0, 0)),      # wc
            pl.BlockSpec((1, Dp), lambda i: (0, 0)),      # bc
            pl.BlockSpec((C, HP), lambda i: (0, 0)),      # head selector (bf16 0/1)
            pl.BlockSpec((HP, C), lambda i: (0, 0)),      # head selector^T
        ],
        out_specs=pl.BlockSpec((1, 1, Dp), lambda i: (i, 0, 0)),
        compiler_params=_cparams(("parallel",)),
    )(xr, ap["pos"].astype(jnp.float32),
      ap["wqkv"].astype(jnp.bfloat16), ap["bqkv"],
      ap["wc"].astype(jnp.bfloat16), ap["bc"],
      ap["sel"], ap["selt"])
    return out.reshape(N, Dp)[:, :output_dim]


# ----------------------------------------------------------------------------
# Plain-JAX glue
# ----------------------------------------------------------------------------

def im2col_3x3(x, stride, k_pad=None):
    # Only used for the single stride-2 stem conv (3 input channels).
    N, H, W, C = x.shape
    Ho = (H + 2 - 3) // stride + 1
    Wo = (W + 2 - 3) // stride + 1
    xp = jnp.pad(x, ((0, 0), (1, 1), (1, 1), (0, 0)))
    cols = []
    for dh in range(3):
        for dw in range(3):
            cols.append(xp[:, dh:dh + (Ho - 1) * stride + 1:stride,
                           dw:dw + (Wo - 1) * stride + 1:stride, :])
    patches = jnp.concatenate(cols, axis=-1).reshape(N * Ho * Wo, 9 * C)
    if k_pad is not None and k_pad > 9 * C:
        patches = jnp.pad(patches, ((0, 0), (0, k_pad - 9 * C)))
    return patches, (N, Ho, Wo)


def conv1x1_bn(x, w_mat, scale, shift, relu=True, residual=None):
    N, H, W, C = x.shape
    res = residual.reshape(N * H * W, -1) if residual is not None else None
    y = matmul_affine(x.reshape(N * H * W, C), w_mat, scale, shift,
                      residual=res, relu=relu)
    return y.reshape(N, H, W, -1)


# ----------------------------------------------------------------------------
# Parameters (channel dims zero-padded to multiples of 128)
# ----------------------------------------------------------------------------

def _bn_params(key, c, cpad):
    k = jax.random.split(key, 4)
    gamma = 1.0 + 0.1 * jax.random.normal(k[0], (c,), jnp.float32)
    beta = 0.1 * jax.random.normal(k[1], (c,), jnp.float32)
    mean = 0.1 * jax.random.normal(k[2], (c,), jnp.float32)
    var = 1.0 + 0.1 * jnp.abs(jax.random.normal(k[3], (c,), jnp.float32))
    scale = gamma / jnp.sqrt(var + 1e-5)
    shift = beta - mean * scale
    return jnp.pad(scale, (0, cpad - c)), jnp.pad(shift, (0, cpad - c))


def _conv_w(key, ksize, cin, cout, cin_pad, cout_pad, taps=False, k_pad_to=None):
    fan_in = ksize * ksize * cin
    w = jax.random.normal(key, (ksize, ksize, cin, cout), jnp.float32)
    w = w * (2.0 / fan_in) ** 0.5
    w = jnp.pad(w, ((0, 0), (0, 0), (0, cin_pad - cin), (0, cout_pad - cout)))
    if taps:
        return w.reshape(ksize * ksize, cin_pad, cout_pad)
    w = w.reshape(ksize * ksize * cin_pad, cout_pad)
    if k_pad_to is not None and k_pad_to > w.shape[0]:
        w = jnp.pad(w, ((0, k_pad_to - w.shape[0]), (0, 0)))
    return w


def _linear(key, cin, cout, cin_pad, cout_pad):
    kw, kb = jax.random.split(key)
    w = jax.random.normal(kw, (cin, cout), jnp.float32) * cin ** -0.5
    b = 0.01 * jax.random.normal(kb, (cout,), jnp.float32)
    w = jnp.pad(w, ((0, cin_pad - cin), (0, cout_pad - cout)))
    b = jnp.pad(b, (0, cout_pad - cout))
    return w, b


def make_modified_resnet_params(key, layers, output_dim, input_resolution=64,
                                width=16, heads=8, reduction=32):
    keys = iter(jax.random.split(key, 512))
    nxt = lambda: next(keys)
    p = {"heads": heads, "output_dim": output_dim}

    w2 = width // 2
    w2p, wp = _cpad(w2), _cpad(width)
    p["conv1_w"] = _conv_w(nxt(), 3, 3, w2, 3, w2p, k_pad_to=_STEM_K)   # (128, w2p)
    p["bn1"] = _bn_params(nxt(), w2, w2p)
    p["conv2_w"] = _conv_w(nxt(), 3, w2, w2, w2p, w2p, taps=True)       # (9, w2p, w2p)
    p["bn2"] = _bn_params(nxt(), w2, w2p)
    p["conv3_w"] = _conv_w(nxt(), 3, w2, width, w2p, wp, taps=True)
    p["bn3"] = _bn_params(nxt(), width, wp)

    inplanes = width

    def make_layer(planes, blocks, stride):
        nonlocal inplanes
        block_params = []
        strides = [stride] + [1] * (blocks - 1)
        for s in strides:
            ip, pp, op = _cpad(inplanes), _cpad(planes), _cpad(planes * 4)
            bp = {
                "stride": s,
                "w1": _conv_w(nxt(), 1, inplanes, planes, ip, pp),
                "bn1": _bn_params(nxt(), planes, pp),
                "w2": _conv_w(nxt(), 3, planes, planes, pp, pp, taps=True),
                "bn2": _bn_params(nxt(), planes, pp),
                "w3": _conv_w(nxt(), 1, planes, planes * 4, pp, op),
                "bn3": _bn_params(nxt(), planes * 4, op),
            }
            if s > 1 or inplanes != planes * 4:
                bp["down_w"] = _conv_w(nxt(), 1, inplanes, planes * 4, ip, op)
                bp["down_bn"] = _bn_params(nxt(), planes * 4, op)
            else:
                bp["down_w"] = None
                bp["down_bn"] = None
            block_params.append(bp)
            inplanes = planes * 4
        return block_params

    p["layer1"] = make_layer(width, layers[0], 1)
    p["layer2"] = make_layer(width * 2, layers[1], 2)
    p["layer3"] = make_layer(width * 4, layers[2], 2)
    p["layer4"] = make_layer(width * 8, layers[3], 1 if reduction <= 16 else 2)

    embed_dim = width * 32
    ep = _cpad(embed_dim)
    dp = _cpad(output_dim)
    spatial = (input_resolution // 32) * (input_resolution // 32)
    ap = {"dh": embed_dim // heads}
    pos = jax.random.normal(nxt(), (spatial + 1, embed_dim), jnp.float32)
    ap["pos"] = jnp.pad(pos * embed_dim ** -0.5, ((0, 0), (0, ep - embed_dim)))
    wq, bq = _linear(nxt(), embed_dim, embed_dim, ep, ep)
    wk, bk = _linear(nxt(), embed_dim, embed_dim, ep, ep)
    wv, bv = _linear(nxt(), embed_dim, embed_dim, ep, ep)
    ap["wqkv"] = jnp.concatenate([wq, wk, wv], axis=1)           # (ep, 3*ep)
    ap["bqkv"] = jnp.concatenate([bq, bk, bv]).reshape(1, 3 * ep)
    wc, bc = _linear(nxt(), embed_dim, output_dim, ep, dp)
    ap["wc"], ap["bc"] = wc, bc.reshape(1, dp)
    # exact 0/1 head selector matrices (bf16 for full-rate MXU); padded head
    # columns and padded embed columns are all-zero.
    hp = _cpad(heads)
    col_ids = jnp.arange(ep) // (embed_dim // heads)
    head_ids = jnp.arange(hp)
    sel = ((col_ids[:, None] == head_ids[None, :]) &
           (head_ids[None, :] < heads)).astype(jnp.bfloat16)
    ap["sel"] = sel                    # (ep, hp)
    ap["selt"] = sel.T                 # (hp, ep)
    p["attnpool"] = ap
    return p


# ----------------------------------------------------------------------------
# Forward
# ----------------------------------------------------------------------------

def bottleneck_forward(x, bp):
    stride = bp["stride"]
    out = conv1x1_bn(x, bp["w1"], *bp["bn1"], relu=True)
    # 3x3 conv; the anti-aliasing avgpool of stride-2 blocks is fused into it.
    out = conv3x3_bn(out, bp["w2"], *bp["bn2"], relu=True, pool=(stride > 1))
    idt = avgpool2x2(x) if stride > 1 else x
    if bp["down_w"] is not None:
        idt = conv1x1_bn(idt, bp["down_w"], *bp["down_bn"], relu=False)
    # final 1x1 conv with fused BN + residual add + ReLU
    N, H, W, _ = out.shape
    Cout = bp["w3"].shape[1]
    y = matmul_affine(out.reshape(N * H * W, -1), bp["w3"], *bp["bn3"],
                      residual=idt.reshape(N * H * W, -1), relu=True)
    return y.reshape(N, H, W, Cout)


def modified_resnet_forward(params, x_nchw):
    x = jnp.transpose(x_nchw, (0, 2, 3, 1)).astype(jnp.bfloat16)   # NCHW -> NHWC
    # stem (conv1 stride-2 via padded im2col, conv2, conv3 with fused avgpool)
    patches, (N, Ho, Wo) = im2col_3x3(x, stride=2, k_pad=_STEM_K)
    y = matmul_affine(patches, params["conv1_w"], *params["bn1"], relu=True)
    x = y.reshape(N, Ho, Wo, -1)
    x = conv3x3_bn(x, params["conv2_w"], *params["bn2"], relu=True)
    x = conv3x3_bn(x, params["conv3_w"], *params["bn3"], relu=True, pool=True)
    # residual stages
    for name in ("layer1", "layer2", "layer3", "layer4"):
        for bp in params[name]:
            x = bottleneck_forward(x, bp)
    # attention pooling (features_only=False path)
    return attnpool_forward(x, params["attnpool"], params["output_dim"])


# ----------------------------------------------------------------------------
# Main
# ----------------------------------------------------------------------------

if __name__ == "__main__":
    key = jax.random.PRNGKey(0)
    pkey, xkey = jax.random.split(key)

    layers = (1, 1, 1, 1)        # tiny synthetic ResNet depth
    width = 16                   # embed_dim = width * 32 = 512
    heads = 8
    output_dim = 128
    input_resolution = 64        # -> 2x2 final feature map, 5 attnpool tokens

    params = make_modified_resnet_params(
        pkey, layers, output_dim=output_dim,
        input_resolution=input_resolution, width=width, heads=heads)

    x = jax.random.normal(xkey, (2, 3, input_resolution, input_resolution),
                          jnp.float32)

    out = modified_resnet_forward(params, x)
    out = jax.block_until_ready(out)

    assert out.shape == (2, output_dim), out.shape
    assert bool(jnp.all(jnp.isfinite(out)))
    print("KERNEL_OK")
</pallas_src>

<mosaic_0001>
module attributes {stable_mosaic.version = 11 : i64} {
  func.func @_mm_affine_nk1_kernel(%arg0: i32, %arg1: i32, %arg2: memref<512x128xbf16, #tpu.memory_space<vmem>>, %arg3: memref<128x128xbf16, #tpu.memory_space<vmem>>, %arg4: memref<1x128xf32, #tpu.memory_space<vmem>>, %arg5: memref<1x128xf32, #tpu.memory_space<vmem>>, %arg6: memref<512x128xbf16, #tpu.memory_space<vmem>>) attributes {dimension_semantics = [#tpu.dimension_semantics<parallel>, #tpu.dimension_semantics<parallel>], iteration_bounds = array<i64: 4, 1>, scalar_prefetch = 0 : i64, scratch_operands = 0 : i64, tpu.core_type = #tpu.core_type<tc>, window_params = [{transform_indices = @transform_0, window_bounds = array<i64: 512, 128>}, {transform_indices = @transform_1, window_bounds = array<i64: 128, 128>}, {transform_indices = @transform_2, window_bounds = array<i64: 1, 128>}, {transform_indices = @transform_3, window_bounds = array<i64: 1, 128>}, {transform_indices = @transform_4, window_bounds = array<i64: 512, 128>}]} {
    %c0 = arith.constant 0 : index
    %c0_0 = arith.constant 0 : index
    %0 = vector.load %arg2[%c0, %c0_0] : memref<512x128xbf16, #tpu.memory_space<vmem>>, vector<512x128xbf16>
    %c0_1 = arith.constant 0 : index
    %c0_2 = arith.constant 0 : index
    %1 = vector.load %arg3[%c0_1, %c0_2] : memref<128x128xbf16, #tpu.memory_space<vmem>>, vector<128x128xbf16>
    %cst = arith.constant dense<0.000000e+00> : vector<512x128xf32>
    %2 = tpu.matmul %0, %1, %cst {dimension_numbers = #tpu.dot_dimension_numbers<[1], [0], [0], [1], [0, 0, 1, 1], [], []>} : vector<512x128xbf16>, vector<128x128xbf16>, vector<512x128xf32> -> vector<512x128xf32>
    %c0_3 = arith.constant 0 : index
    %c0_4 = arith.constant 0 : index
    %3 = vector.load %arg4[%c0_3, %c0_4] : memref<1x128xf32, #tpu.memory_space<vmem>>, vector<1x128xf32>
    %4 = vector.broadcast %3 : vector<1x128xf32> to vector<512x128xf32>
    %5 = arith.mulf %2, %4 : vector<512x128xf32>
    %c0_5 = arith.constant 0 : index
    %c0_6 = arith.constant 0 : index
    %6 = vector.load %arg5[%c0_5, %c0_6] : memref<1x128xf32, #tpu.memory_space<vmem>>, vector<1x128xf32>
    %7 = vector.broadcast %6 : vector<1x128xf32> to vector<512x128xf32>
    %8 = arith.addf %5, %7 : vector<512x128xf32>
    %cst_7 = arith.constant 0.000000e+00 : f32
    %9 = vector.broadcast %cst_7 : f32 to vector<512x128xf32>
    %10 = arith.maximumf %8, %9 : vector<512x128xf32>
    %11 = arith.truncf %10 : vector<512x128xf32> to vector<512x128xbf16>
    %c0_8 = arith.constant 0 : index
    %c0_9 = arith.constant 0 : index
    %12 = vector.load %arg6[%c0_8, %c0_9] : memref<512x128xbf16, #tpu.memory_space<vmem>>, vector<512x128xbf16>
    tpu.vector_store %arg6[%c0_8, %c0_9], %11 {strides = array<i32>} : memref<512x128xbf16, #tpu.memory_space<vmem>>, vector<512x128xbf16>,
    return
  }
  func.func @transform_0(%arg0: i32, %arg1: i32) -> (i32, i32) {
    %c0_i32 = arith.constant 0 : i32
    %c0_i32_0 = arith.constant 0 : i32
    return %arg0, %c0_i32 : i32, i32
  }
  func.func @transform_1(%arg0: i32, %arg1: i32) -> (i32, i32) {
    %c0_i32 = arith.constant 0 : i32
    %c0_i32_0 = arith.constant 0 : i32
    return %c0_i32, %arg1 : i32, i32
  }
  func.func @transform_2(%arg0: i32, %arg1: i32) -> (i32, i32) {
    %c0_i32 = arith.constant 0 : i32
    %c0_i32_0 = arith.constant 0 : i32
    return %c0_i32, %arg1 : i32, i32
  }
  func.func @transform_3(%arg0: i32, %arg1: i32) -> (i32, i32) {
    %c0_i32 = arith.constant 0 : i32
    %c0_i32_0 = arith.constant 0 : i32
    return %c0_i32, %arg1 : i32, i32
  }
  func.func @transform_4(%arg0: i32, %arg1: i32) -> (i32, i32) {
    %c0_i32 = arith.constant 0 : i32
    return %arg0, %arg1 : i32, i32
  }
}

</mosaic_0001>

<llo_original>
// kernel: tpu_custom_call.1
$region0: #{tpu_custom_call.1}
  #allocation0 [shape = 'u32[]', space=smem, size = 0x4, offset = 0x4, fixed_abs, tag = 'smem constant byte address 0x4 - core index']
  #allocation1 [shape = 'u32[144,128]{1,0:T(1,128)}', space=vmem, size = 0x12000, scoped, tag = 'internal scratch']
  %s0 = inlined_call_operand.hbm [shape: bf16[2048,128], index: 0, kind: input, shape index: {}]
  %s1 = inlined_call_operand.hbm [shape: bf16[128,128], index: 1, kind: input, shape index: {}]
  %s2 = inlined_call_operand.vmem [shape: f32[1,128], index: 2, kind: input, shape index: {}]
  %s3 = inlined_call_operand.vmem [shape: f32[1,128], index: 3, kind: input, shape index: {}]
  %s4 = inlined_call_operand.hbm [shape: bf16[2048,128], index: 4, kind: output, shape index: {}]
  %s5 = sld [smem:[#allocation0]]
  $region57: #{tpu_custom_call.1} parent=0
    _
  %s7 = ssub.s32 1, %s5
  %s8 = scalar_select 0, %s7, %s5
  $region1: #{tpu_custom_call.1} parent=0
    #allocation2 [shape = 'u8[262144]{0}', space=vmem, size = 0x40000, scoped, tag = 'input window, operand 0']
    #allocation3 [shape = 's32[2]{0}', space=sflag, size = 0x8, scoped, tag = 'scoped memory for tpu_custom_call.1']
    #allocation4 [shape = 's32[2]{0}', space=sflag, size = 0x8, scoped, tag = 'scoped memory for tpu_custom_call.1']
    #allocation5 [shape = 'u8[32768]{0}', space=vmem, size = 0x8000, scoped, tag = 'input window, operand 1, single buffered']
    #allocation6 [shape = 's32[1]{0}', space=sflag, size = 0x4, scoped, tag = 'scoped memory for tpu_custom_call.1']
    #allocation7 [shape = 'u8[262144]{0}', space=vmem, size = 0x40000, scoped, tag = 'output window, operand 0']
    %9 = vsyncpa [#allocation3], 0
    %s10 = scalar_lea.sflag [#allocation3], 1
    %11 = vsyncpa %s10, 0
    %12 = vsyncpa [#allocation6], 0
    %13 = vsyncpa [#allocation4], 0
    %s14 = scalar_lea.sflag [#allocation4], 1
    %15 = vsyncpa %s14, 0
    loop: start=0, step=1, limit=6
    $region2: #{tpu_custom_call.1} parent=1 // loop_pre_header
      _
    $region3: #{tpu_custom_call.1} parent=1 // loop_header
      %s17 = sphi 0, %s21
      %p18 = scmp.ge.s32.totalorder %s17, 6
      %s24 = sphi 0, %s36
      %s25 = sphi 0, %s32
      %s26 = sphi 0, %s24
      %s27 = sphi 0, %s25
      %s28 = sphi 0, %s26
      %s29 = sphi 0, %s27
      %s39 = sphi 0, %s41
      %s42 = sphi 0, %s39
      %s43 = sphi 0, %s42
      %s59 = sphi 0, %s43
      %s65 = sphi 0, %s67
      %s68 = sphi 0, %s65
      %s69 = sphi 0, %s68
      %s85 = sphi 0, %s69
      %s91 = sphi 0, %s93
      %s94 = sphi 0, %s91
      %s95 = sphi 0, %s94
      %s111 = sphi 0, %s95
      %s117 = sphi 0, %s119
      %s120 = sphi 0, %s117
      %s121 = sphi 0, %s120
      %s137 = sphi 0, %s121
      %s145 = sphi 0, %s147
      %s148 = sphi 0, %s145
      %s149 = sphi 0, %s148
      %s165 = sphi 0, %s149
    $region4: #{tpu_custom_call.1} parent=1 // loop_header_branch
      %20 = sbr.rel (%p18) target = $region8
    $region5: #{tpu_custom_call.1} parent=1 // loop_body
      %s22 = ssub.s32 %s17, 1
      %s23 = ssub.s32 %s17, 2
      %s30 = sadd.s32 1, %s25
      %p31 = scmp.ge.s32.totalorder %s30, 1
      %s32 = scalar_select %p31, 0, %s30
      %s33 = sadd.s32 1, %s24
      %s34 = scalar_select %p31, %s33, %s24
      %p35 = scmp.ge.s32.totalorder %s34, 4
      %s36 = scalar_select %p35, 0, %s34
      %s37 = ssub.s32 %s24, %s36
      %p38 = scmp.eq.s32.totalorder %s37, 0
      %s40 = sadd.s32 %s39, 1
      %s41 = scalar_select %p38, %s39, %s40
      %p44 = pneg %p38
      %p45 = scmp.eq.s32.totalorder %s17, 3
      %p46 = por %p44, %p45
      %p47 = scmp.ne.s32.totalorder %s39, %s42
      %p48 = scmp.eq.s32.totalorder %s17, 0
      %p49 = por %p47, %p48
      %p50 = scmp.ne.s32.totalorder %s39, %s42
      %p51 = scmp.eq.s32.totalorder %s22, 3
      %p52 = por %p50, %p51
      %p53 = scmp.ne.s32.totalorder %s42, %s43
      %p54 = scmp.eq.s32.totalorder %s22, 0
      %p55 = por %p53, %p54
      %p56 = scmp.ne.s32.totalorder %s42, %s43
      %p57 = scmp.eq.s32.totalorder %s23, 3
      %p58 = por %p56, %p57
      %p60 = scmp.ne.s32.totalorder %s43, %s59
      %p61 = scmp.eq.s32.totalorder %s23, 0
      %p62 = por %p60, %p61
      %s63 = ssub.s32 %s25, %s32
      %p64 = scmp.eq.s32.totalorder %s63, 0
      %s66 = sadd.s32 %s65, 1
      %s67 = scalar_select %p64, %s65, %s66
      %p70 = pneg %p64
      %p71 = scmp.eq.s32.totalorder %s17, 3
      %p72 = por %p70, %p71
      %p73 = scmp.ne.s32.totalorder %s65, %s68
      %p74 = scmp.eq.s32.totalorder %s17, 0
      %p75 = por %p73, %p74
      %p76 = scmp.ne.s32.totalorder %s65, %s68
      %p77 = scmp.eq.s32.totalorder %s22, 3
      %p78 = por %p76, %p77
      %p79 = scmp.ne.s32.totalorder %s68, %s69
      %p80 = scmp.eq.s32.totalorder %s22, 0
      %p81 = por %p79, %p80
      %p82 = scmp.ne.s32.totalorder %s68, %s69
      %p83 = scmp.eq.s32.totalorder %s23, 3
      %p84 = por %p82, %p83
      %p86 = scmp.ne.s32.totalorder %s69, %s85
      %p87 = scmp.eq.s32.totalorder %s23, 0
      %p88 = por %p86, %p87
      %s89 = ssub.s32 %s25, %s32
      %p90 = scmp.eq.s32.totalorder %s89, 0
      %s92 = sadd.s32 %s91, 1
      %s93 = scalar_select %p90, %s91, %s92
      %p96 = pneg %p90
      %p97 = scmp.eq.s32.totalorder %s17, 3
      %p98 = por %p96, %p97
      %p99 = scmp.ne.s32.totalorder %s91, %s94
      %p100 = scmp.eq.s32.totalorder %s17, 0
      %p101 = por %p99, %p100
      %p102 = scmp.ne.s32.totalorder %s91, %s94
      %p103 = scmp.eq.s32.totalorder %s22, 3
      %p104 = por %p102, %p103
      %p105 = scmp.ne.s32.totalorder %s94, %s95
      %p106 = scmp.eq.s32.totalorder %s22, 0
      %p107 = por %p105, %p106
      %p108 = scmp.ne.s32.totalorder %s94, %s95
      %p109 = scmp.eq.s32.totalorder %s23, 3
      %p110 = por %p108, %p109
      %p112 = scmp.ne.s32.totalorder %s95, %s111
      %p113 = scmp.eq.s32.totalorder %s23, 0
      %p114 = por %p112, %p113
      %s115 = ssub.s32 %s25, %s32
      %p116 = scmp.eq.s32.totalorder %s115, 0
      %s118 = sadd.s32 %s117, 1
      %s119 = scalar_select %p116, %s117, %s118
      %p122 = pneg %p116
      %p123 = scmp.eq.s32.totalorder %s17, 3
      %p124 = por %p122, %p123
      %p125 = scmp.ne.s32.totalorder %s117, %s120
      %p126 = scmp.eq.s32.totalorder %s17, 0
      %p127 = por %p125, %p126
      %p128 = scmp.ne.s32.totalorder %s117, %s120
      %p129 = scmp.eq.s32.totalorder %s22, 3
      %p130 = por %p128, %p129
      %p131 = scmp.ne.s32.totalorder %s120, %s121
      %p132 = scmp.eq.s32.totalorder %s22, 0
      %p133 = por %p131, %p132
      %p134 = scmp.ne.s32.totalorder %s120, %s121
      %p135 = scmp.eq.s32.totalorder %s23, 3
      %p136 = por %p134, %p135
      %p138 = scmp.ne.s32.totalorder %s121, %s137
      %p139 = scmp.eq.s32.totalorder %s23, 0
      %p140 = por %p138, %p139
      %s141 = ssub.s32 %s24, %s36
      %s142 = ssub.s32 %s25, %s32
      %s143 = sor.u32 %s141, %s142
      %p144 = scmp.eq.s32.totalorder %s143, 0
      %s146 = sadd.s32 %s145, 1
      %s147 = scalar_select %p144, %s145, %s146
      %p150 = pneg %p144
      %p151 = scmp.eq.s32.totalorder %s17, 3
      %p152 = por %p150, %p151
      %p153 = scmp.ne.s32.totalorder %s145, %s148
      %p154 = scmp.eq.s32.totalorder %s17, 0
      %p155 = por %p153, %p154
      %p156 = scmp.ne.s32.totalorder %s145, %s148
      %p157 = scmp.eq.s32.totalorder %s22, 3
      %p158 = por %p156, %p157
      %p159 = scmp.ne.s32.totalorder %s148, %s149
      %p160 = scmp.eq.s32.totalorder %s22, 0
      %p161 = por %p159, %p160
      %p162 = scmp.ne.s32.totalorder %s148, %s149
      %p163 = scmp.eq.s32.totalorder %s23, 3
      %p164 = por %p162, %p163
      %p166 = scmp.ne.s32.totalorder %s149, %s165
      %p167 = scmp.eq.s32.totalorder %s23, 0
      %p168 = por %p166, %p167
      %p169 = scmp.le.s32.totalorder 1, %s17
      %p170 = scmp.lt.s32.totalorder %s17, 5
      %p171 = pnand %p169, %p170
      %p172 = pneg %p171
      // Predicated region
      $region9: #{tpu_custom_call.1} parent=5 // pred_check
        _
      $region10: #{tpu_custom_call.1} parent=5 // pred_check_branch
        %174 = sbr.rel (%p171) target = $region12
      $region11: #{tpu_custom_call.1} parent=5 // pred_region
        %s175 = ssub.s32 %s17, 1
        // Predicated region
        $region13: #{tpu_custom_call.1} parent=11 // pred_check
          %p176 = pneg %p81
        $region14: #{tpu_custom_call.1} parent=11 // pred_check_branch
          %178 = sbr.rel (%p176) target = $region16
        $region15: #{tpu_custom_call.1} parent=11 // pred_region
          %s180 = ssub.s32 1024, 1024
          %181 = vsyncadd [#allocation6], %s180
          %s182 = smul.addr %s27, 64
          %s183 = scalar_lea.hbm %s1, %s182
          %s184 = sshll.u32 [#allocation5], 4
          %s185 = int_to_ptr.vmem [resolvable:$true] %s184
          %190 = dma.hbm_to_vmem [thread:$0]  %s183, 1024, %s185, [#allocation6], 64, 64, 4
        $region16: #{tpu_custom_call.1} parent=11 // pred_fallthru
          _
        // Predicated region
        $region17: #{tpu_custom_call.1} parent=11 // pred_check
          %p191 = pneg %p107
        $region18: #{tpu_custom_call.1} parent=11 // pred_check_branch
          %193 = sbr.rel (%p191) target = $region20
        $region19: #{tpu_custom_call.1} parent=11 // pred_region
          %p194 = scmp.lt.s32.totalorder %s27, 0
          %s195 = scalar_select %p194, %s27, 0
          %s196 = scalar_lea.vmem %s2, %s195
        $region20: #{tpu_custom_call.1} parent=11 // pred_fallthru
          _
        // Predicated region
        $region21: #{tpu_custom_call.1} parent=11 // pred_check
          %p197 = pneg %p133
        $region22: #{tpu_custom_call.1} parent=11 // pred_check_branch
          %199 = sbr.rel (%p197) target = $region24
        $region23: #{tpu_custom_call.1} parent=11 // pred_region
          %p200 = scmp.lt.s32.totalorder %s27, 0
          %s201 = scalar_select %p200, %s27, 0
          %s202 = scalar_lea.vmem %s3, %s201
        $region24: #{tpu_custom_call.1} parent=11 // pred_fallthru
          _
      $region12: #{tpu_custom_call.1} parent=5 // pred_fallthru
        _
      %p203 = scmp.lt.s32.totalorder %s17, 4
      // Predicated region
      $region25: #{tpu_custom_call.1} parent=5 // pred_check
        %p204 = pneg %p203
      $region26: #{tpu_custom_call.1} parent=5 // pred_check_branch
        %206 = sbr.rel (%p204) target = $region28
      $region27: #{tpu_custom_call.1} parent=5 // pred_region
        // Predicated region
        $region29: #{tpu_custom_call.1} parent=27 // pred_check
          %p207 = pneg %p49
        $region30: #{tpu_custom_call.1} parent=27 // pred_check_branch
          %209 = sbr.rel (%p207) target = $region32
        $region31: #{tpu_custom_call.1} parent=27 // pred_region
          %s210 = sand.u32 %s39, 1
          %s211 = scalar_lea.sflag [#allocation3], %s210
          %s212 = sand.u32 %s39, 1
          %s213 = smul.addr %s212, 256
          %s214 = scalar_lea.vmem [#allocation2], %s213
          %s215 = smul.u32 64, %s24
          %s217 = ssub.s32 4096, 4096
          %218 = vsyncadd %s211, %s217
          %s219 = smul.addr %s215, 64
          %s220 = scalar_lea.hbm %s0, %s219
          %s221 = sshll.u32 %s214, 4
          %s222 = int_to_ptr.vmem [resolvable:$true] %s221
          %227 = dma.hbm_to_vmem [thread:$0]  %s220, 4096, %s222, %s211, 64, 64, 4
        $region32: #{tpu_custom_call.1} parent=27 // pred_fallthru
          _
      $region28: #{tpu_custom_call.1} parent=5 // pred_fallthru
        _
      %p228 = scmp.le.s32.totalorder 1, %s17
      %p229 = scmp.lt.s32.totalorder %s17, 5
      %p230 = pnand %p228, %p229
      %p231 = pneg %p230
      // Predicated region
      $region33: #{tpu_custom_call.1} parent=5 // pred_check
        _
      $region34: #{tpu_custom_call.1} parent=5 // pred_check_branch
        %233 = sbr.rel (%p230) target = $region36
      $region35: #{tpu_custom_call.1} parent=5 // pred_region
        %s234 = ssub.s32 %s17, 1
        %s235 = sand.u32 %s42, 1
        %s236 = scalar_lea.sflag [#allocation3], %s235
        %s237 = sand.u32 %s42, 1
        %s238 = smul.addr %s237, 256
        %s239 = scalar_lea.vmem [#allocation2], %s238
        // Predicated region
        $region37: #{tpu_custom_call.1} parent=35 // pred_check
          %p240 = pneg %p55
        $region38: #{tpu_custom_call.1} parent=35 // pred_check_branch
          %242 = sbr.rel (%p240) target = $region40
        $region39: #{tpu_custom_call.1} parent=35 // pred_region
          %243 = dma.done %s236, 4096
        $region40: #{tpu_custom_call.1} parent=35 // pred_fallthru
          _
        // Predicated region
        $region41: #{tpu_custom_call.1} parent=35 // pred_check
          %p244 = pneg %p81
        $region42: #{tpu_custom_call.1} parent=35 // pred_check_branch
          %246 = sbr.rel (%p244) target = $region44
        $region43: #{tpu_custom_call.1} parent=35 // pred_region
          %247 = dma.done [#allocation6], 1024
        $region44: #{tpu_custom_call.1} parent=35 // pred_fallthru
          _
        %s248 = sand.u32 %s42, 1
        %s249 = scalar_lea.sflag [#allocation3], %s248
        %s250 = sand.u32 %s42, 1
        %s251 = smul.addr %s250, 256
        %s252 = scalar_lea.vmem [#allocation2], %s251
        %p253 = pneg %p55
        %p254 = pneg %p52
        %p255 = pneg %p81
        %p256 = pneg %p78
        %p257 = scmp.lt.s32.totalorder %s27, 0
        %s258 = scalar_select %p257, %s27, 0
        %s259 = scalar_lea.vmem %s2, %s258
        %p260 = pneg %p107
        %p261 = pneg %p104
        %p262 = scmp.lt.s32.totalorder %s27, 0
        %s263 = scalar_select %p262, %s27, 0
        %s264 = scalar_lea.vmem %s3, %s263
        %p265 = pneg %p133
        %p266 = pneg %p130
        %p267 = pneg %p161
        %p268 = pneg %p158
        %s269 = sand.u32 %s148, 1
        %s270 = scalar_lea.sflag [#allocation4], %s269
        %s271 = sand.u32 %s148, 1
        %s272 = smul.addr %s271, 256
        %s273 = scalar_lea.vmem [#allocation7], %s272
        %s274 = smul.u32 64, %s26
        %p275 = scmp.lt.s32.totalorder %s27, 0
        %s276 = scalar_select %p275, %s27, 0
        %s277 = scalar_lea.vmem %s2, %s276
        %p278 = scmp.lt.s32.totalorder %s27, 0
        %s279 = scalar_select %p278, %s27, 0
        %s280 = scalar_lea.vmem %s3, %s279
        %s281 = smul.u32 64, %s26
        %v283 = vld [vmem:[%s239] sm:$0xf]
        %v284 = vld [vmem:[%s239 + $0x4] sm:$0xf]
        %v285 = vld [vmem:[%s239 + $0x8] sm:$0xf]
        %v286 = vld [vmem:[%s239 + $0xc] sm:$0xf]
        %v287 = vld [vmem:[%s239 + $0x10] sm:$0xf]
        %v288 = vld [vmem:[%s239 + $0x14] sm:$0xf]
        %v289 = vld [vmem:[%s239 + $0x18] sm:$0xf]
        %v290 = vld [vmem:[%s239 + $0x1c] sm:$0xf]
        %v291 = vld [vmem:[%s239 + $0x20] sm:$0xf]
        %v292 = vld [vmem:[%s239 + $0x24] sm:$0xf]
        %v293 = vld [vmem:[%s239 + $0x28] sm:$0xf]
        %v294 = vld [vmem:[%s239 + $0x2c] sm:$0xf]
        %v295 = vld [vmem:[%s239 + $0x30] sm:$0xf]
        %v296 = vld [vmem:[%s239 + $0x34] sm:$0xf]
        %v297 = vld [vmem:[%s239 + $0x38] sm:$0xf]
        %v298 = vld [vmem:[%s239 + $0x3c] sm:$0xf]
        %v299 = vld [vmem:[%s239 + $0x40] sm:$0xf]
        %v300 = vld [vmem:[%s239 + $0x44] sm:$0xf]
        %v301 = vld [vmem:[%s239 + $0x48] sm:$0xf]
        %v302 = vld [vmem:[%s239 + $0x4c] sm:$0xf]
        %v303 = vld [vmem:[%s239 + $0x50] sm:$0xf]
        %v304 = vld [vmem:[%s239 + $0x54] sm:$0xf]
        %v305 = vld [vmem:[%s239 + $0x58] sm:$0xf]
        %v306 = vld [vmem:[%s239 + $0x5c] sm:$0xf]
        %v307 = vld [vmem:[%s239 + $0x60] sm:$0xf]
        %v308 = vld [vmem:[%s239 + $0x64] sm:$0xf]
        %v309 = vld [vmem:[%s239 + $0x68] sm:$0xf]
        %v310 = vld [vmem:[%s239 + $0x6c] sm:$0xf]
        %v311 = vld [vmem:[%s239 + $0x70] sm:$0xf]
        %v312 = vld [vmem:[%s239 + $0x74] sm:$0xf]
        %v313 = vld [vmem:[%s239 + $0x78] sm:$0xf]
        %v314 = vld [vmem:[%s239 + $0x7c] sm:$0xf]
        %v315 = vld [vmem:[%s239 + $0x80] sm:$0xf]
        %v316 = vld [vmem:[%s239 + $0x84] sm:$0xf]
        %v317 = vld [vmem:[%s239 + $0x88] sm:$0xf]
        %v318 = vld [vmem:[%s239 + $0x8c] sm:$0xf]
        %v319 = vld [vmem:[%s239 + $0x90] sm:$0xf]
        %v320 = vld [vmem:[%s239 + $0x94] sm:$0xf]
        %v321 = vld [vmem:[%s239 + $0x98] sm:$0xf]
        %v322 = vld [vmem:[%s239 + $0x9c] sm:$0xf]
        %v323 = vld [vmem:[%s239 + $0xa0] sm:$0xf]
        %v324 = vld [vmem:[%s239 + $0xa4] sm:$0xf]
        %v325 = vld [vmem:[%s239 + $0xa8] sm:$0xf]
        %v326 = vld [vmem:[%s239 + $0xac] sm:$0xf]
        %v327 = vld [vmem:[%s239 + $0xb0] sm:$0xf]
        %v328 = vld [vmem:[%s239 + $0xb4] sm:$0xf]
        %v329 = vld [vmem:[%s239 + $0xb8] sm:$0xf]
        %v330 = vld [vmem:[%s239 + $0xbc] sm:$0xf]
        %v331 = vld [vmem:[%s239 + $0xc0] sm:$0xf]
        %v332 = vld [vmem:[%s239 + $0xc4] sm:$0xf]
        %v333 = vld [vmem:[%s239 + $0xc8] sm:$0xf]
        %v334 = vld [vmem:[%s239 + $0xcc] sm:$0xf]
        %v335 = vld [vmem:[%s239 + $0xd0] sm:$0xf]
        %v336 = vld [vmem:[%s239 + $0xd4] sm:$0xf]
        %v337 = vld [vmem:[%s239 + $0xd8] sm:$0xf]
        %v338 = vld [vmem:[%s239 + $0xdc] sm:$0xf]
        %v339 = vld [vmem:[%s239 + $0xe0] sm:$0xf]
        %v340 = vld [vmem:[%s239 + $0xe4] sm:$0xf]
        %v341 = vld [vmem:[%s239 + $0xe8] sm:$0xf]
        %v342 = vld [vmem:[%s239 + $0xec] sm:$0xf]
        %v343 = vld [vmem:[%s239 + $0xf0] sm:$0xf]
        %v344 = vld [vmem:[%s239 + $0xf4] sm:$0xf]
        %v345 = vld [vmem:[%s239 + $0xf8] sm:$0xf]
        %v346 = vld [vmem:[%s239 + $0xfc] sm:$0xf]
        %v347 = vld [vmem:[#allocation5] sm:$0xf]
        %v348 = vld [vmem:[#allocation5 + $0x4] sm:$0xf]
        %v349 = vld [vmem:[#allocation5 + $0x8] sm:$0xf]
        %v350 = vld [vmem:[#allocation5 + $0xc] sm:$0xf]
        %v351 = vld [vmem:[#allocation5 + $0x10] sm:$0xf]
        %v352 = vld [vmem:[#allocation5 + $0x14] sm:$0xf]
        %v353 = vld [vmem:[#allocation5 + $0x18] sm:$0xf]
        %v354 = vld [vmem:[#allocation5 + $0x1c] sm:$0xf]
        %v355 = vld [vmem:[#allocation5 + $0x20] sm:$0xf]
        %v356 = vld [vmem:[#allocation5 + $0x24] sm:$0xf]
        %v357 = vld [vmem:[#allocation5 + $0x28] sm:$0xf]
        %v358 = vld [vmem:[#allocation5 + $0x2c] sm:$0xf]
        %v359 = vld [vmem:[#allocation5 + $0x30] sm:$0xf]
        %v360 = vld [vmem:[#allocation5 + $0x34] sm:$0xf]
        %v361 = vld [vmem:[#allocation5 + $0x38] sm:$0xf]
        %v362 = vld [vmem:[#allocation5 + $0x3c] sm:$0xf]
        %v427 = vunpack.c.l.b16 %v283
        %v428 = vunpack.c.l.b16 %v284
        %v429 = vunpack.c.l.b16 %v285
        %v430 = vunpack.c.l.b16 %v286
        %v431 = vunpack.c.l.b16 %v287
        %v432 = vunpack.c.l.b16 %v288
        %v433 = vunpack.c.l.b16 %v289
        %v434 = vunpack.c.l.b16 %v290
        %v435 = vunpack.c.l.b16 %v291
        %v436 = vunpack.c.l.b16 %v292
        %v437 = vunpack.c.l.b16 %v293
        %v438 = vunpack.c.l.b16 %v294
        %v439 = vunpack.c.l.b16 %v295
        %v440 = vunpack.c.l.b16 %v296
        %v441 = vunpack.c.l.b16 %v297
        %v442 = vunpack.c.l.b16 %v298
        %v443 = vunpack.c.l.b16 %v299
        %v444 = vunpack.c.l.b16 %v300
        %v445 = vunpack.c.l.b16 %v301
        %v446 = vunpack.c.l.b16 %v302
        %v447 = vunpack.c.l.b16 %v303
        %v448 = vunpack.c.l.b16 %v304
        %v449 = vunpack.c.l.b16 %v305
        %v450 = vunpack.c.l.b16 %v306
        %v451 = vunpack.c.l.b16 %v307
        %v452 = vunpack.c.l.b16 %v308
        %v453 = vunpack.c.l.b16 %v309
        %v454 = vunpack.c.l.b16 %v310
        %v455 = vunpack.c.l.b16 %v311
        %v456 = vunpack.c.l.b16 %v312
        %v457 = vunpack.c.l.b16 %v313
        %v458 = vunpack.c.l.b16 %v314
        %v459 = vunpack.c.l.b16 %v315
        %v460 = vunpack.c.l.b16 %v316
        %v461 = vunpack.c.l.b16 %v317
        %v462 = vunpack.c.l.b16 %v318
        %v463 = vunpack.c.l.b16 %v319
        %v464 = vunpack.c.l.b16 %v320
        %v465 = vunpack.c.l.b16 %v321
        %v466 = vunpack.c.l.b16 %v322
        %v467 = vunpack.c.l.b16 %v323
        %v468 = vunpack.c.l.b16 %v324
        %v469 = vunpack.c.l.b16 %v325
        %v470 = vunpack.c.l.b16 %v326
        %v471 = vunpack.c.l.b16 %v327
        %v472 = vunpack.c.l.b16 %v328
        %v473 = vunpack.c.l.b16 %v329
        %v474 = vunpack.c.l.b16 %v330
        %v475 = vunpack.c.l.b16 %v331
        %v476 = vunpack.c.l.b16 %v332
        %v477 = vunpack.c.l.b16 %v333
        %v478 = vunpack.c.l.b16 %v334
        %v479 = vunpack.c.l.b16 %v335
        %v480 = vunpack.c.l.b16 %v336
        %v481 = vunpack.c.l.b16 %v337
        %v482 = vunpack.c.l.b16 %v338
        %v483 = vunpack.c.l.b16 %v339
        %v484 = vunpack.c.l.b16 %v340
        %v485 = vunpack.c.l.b16 %v341
        %v486 = vunpack.c.l.b16 %v342
        %v487 = vunpack.c.l.b16 %v343
        %v488 = vunpack.c.l.b16 %v344
        %v489 = vunpack.c.l.b16 %v345
        %v490 = vunpack.c.l.b16 %v346
        %v491 = vpack.c.b16 %v428, %v427
        %v492 = vpack.c.b16 %v430, %v429
        %v493 = vpack.c.b16 %v432, %v431
        %v494 = vpack.c.b16 %v434, %v433
        %v495 = vpack.c.b16 %v436, %v435
        %v496 = vpack.c.b16 %v438, %v437
        %v497 = vpack.c.b16 %v440, %v439
        %v498 = vpack.c.b16 %v442, %v441
        %v499 = vpack.c.b16 %v444, %v443
        %v500 = vpack.c.b16 %v446, %v445
        %v501 = vpack.c.b16 %v448, %v447
        %v502 = vpack.c.b16 %v450, %v449
        %v503 = vpack.c.b16 %v452, %v451
        %v504 = vpack.c.b16 %v454, %v453
        %v505 = vpack.c.b16 %v456, %v455
        %v506 = vpack.c.b16 %v458, %v457
        %v507 = vpack.c.b16 %v460, %v459
        %v508 = vpack.c.b16 %v462, %v461
        %v509 = vpack.c.b16 %v464, %v463
        %v510 = vpack.c.b16 %v466, %v465
        %v511 = vpack.c.b16 %v468, %v467
        %v512 = vpack.c.b16 %v470, %v469
        %v513 = vpack.c.b16 %v472, %v471
        %v514 = vpack.c.b16 %v474, %v473
        %v515 = vpack.c.b16 %v476, %v475
        %v516 = vpack.c.b16 %v478, %v477
        %v517 = vpack.c.b16 %v480, %v479
        %v518 = vpack.c.b16 %v482, %v481
        %v519 = vpack.c.b16 %v484, %v483
        %v520 = vpack.c.b16 %v486, %v485
        %v521 = vpack.c.b16 %v488, %v487
        %v522 = vpack.c.b16 %v490, %v489
        %v571 = vunpack.c.l.b16 %v347
        %v572 = vunpack.c.l.b16 %v348
        %v573 = vunpack.c.l.b16 %v349
        %v574 = vunpack.c.l.b16 %v350
        %v575 = vunpack.c.l.b16 %v351
        %v576 = vunpack.c.l.b16 %v352
        %v577 = vunpack.c.l.b16 %v353
        %v578 = vunpack.c.l.b16 %v354
        %v579 = vunpack.c.l.b16 %v355
        %v580 = vunpack.c.l.b16 %v356
        %v581 = vunpack.c.l.b16 %v357
        %v582 = vunpack.c.l.b16 %v358
        %v583 = vunpack.c.l.b16 %v359
        %v584 = vunpack.c.l.b16 %v360
        %v585 = vunpack.c.l.b16 %v361
        %v586 = vunpack.c.l.b16 %v362
        %v587 = vpack.c.b16 %v572, %v571
        %v588 = vpack.c.b16 %v574, %v573
        %v589 = vpack.c.b16 %v576, %v575
        %v590 = vpack.c.b16 %v578, %v577
        %v591 = vpack.c.b16 %v580, %v579
        %v592 = vpack.c.b16 %v582, %v581
        %v593 = vpack.c.b16 %v584, %v583
        %v594 = vpack.c.b16 %v586, %v585
        %603 = vmatprep.subr.bf16.mxu0 0
        %604 = vmatpush1.bf16.msra.mxu0 %v594
        %605 = vmatprep.subr.bf16.mxu0 0
        %606 = vmatpush1.bf16.msra.mxu0 %v593
        %607 = vmatprep.subr.bf16.mxu0 0
        %608 = vmatpush1.bf16.msra.mxu0 %v592
        %609 = vmatprep.subr.bf16.mxu0 0
        %610 = vmatpush1.bf16.msra.mxu0 %v591
        %611 = vmatprep.subr.bf16.mxu0 0
        %612 = vmatpush1.bf16.msra.mxu0 %v590
        %613 = vmatprep.subr.bf16.mxu0 0
        %614 = vmatpush1.bf16.msra.mxu0 %v589
        %615 = vmatprep.subr.bf16.mxu0 0
        %616 = vmatpush1.bf16.msra.mxu0 %v588
        %617 = vmatprep.subr.bf16.mxu0 0
        %618 = vmatpush1.bf16.msra.mxu0 %v587
        %619 = vmatprep.subr.bf16.mxu0 0
        %620 = vmatpush2.bf16.msra.mxu0 0
        %621 = vmatprep.subr.bf16.mxu0 0
        %622 = vmatpush2.bf16.msra.mxu0 0
        %623 = vmatprep.subr.bf16.mxu0 0
        %624 = vmatpush2.bf16.msra.mxu0 0
        %625 = vmatprep.subr.bf16.mxu0 0
        %626 = vmatpush2.bf16.msra.mxu0 0
        %627 = vmatprep.subr.bf16.mxu0 0
        %628 = vmatpush2.bf16.msra.mxu0 0
        %629 = vmatprep.subr.bf16.mxu0 0
        %630 = vmatpush2.bf16.msra.mxu0 0
        %631 = vmatprep.subr.bf16.mxu0 0
        %632 = vmatpush2.bf16.msra.mxu0 0
        %633 = vmatprep.subr.bf16.mxu0 0
        %634 = vmatpush2.bf16.msra.mxu0 0
        %635 = vmatprep.mubr.bf16.mxu0 0
        %636 = vmatmul.mubr.bf16.gmra.mxu0 %v491
        %v637 = vpop.f32.mrf.mxu0
        %v638 = vadd.f32 0.0, %v637
        %v639 = vpop.f32.mrf.mxu0
        %v640 = vpop.f32.mrf.mxu0
        %v641 = vadd.f32 0.0, %v640
        %v642 = vpop.f32.mrf.mxu0
        %643 = vmatprep.mubr.bf16.mxu0 0
        %644 = vmatmul.mubr.bf16.gmra.mxu0 %v492
        %v645 = vpop.f32.mrf.mxu0
        %v646 = vadd.f32 0.0, %v645
        %v647 = vpop.f32.mrf.mxu0
        %v648 = vpop.f32.mrf.mxu0
        %v649 = vadd.f32 0.0, %v648
        %v650 = vpop.f32.mrf.mxu0
        %651 = vmatprep.mubr.bf16.mxu0 0
        %652 = vmatmul.mubr.bf16.gmra.mxu0 %v493
        %v653 = vpop.f32.mrf.mxu0
        %v654 = vadd.f32 0.0, %v653
        %v655 = vpop.f32.mrf.mxu0
        %v656 = vpop.f32.mrf.mxu0
        %v657 = vadd.f32 0.0, %v656
        %v658 = vpop.f32.mrf.mxu0
        %659 = vmatprep.mubr.bf16.mxu0 0
        %660 = vmatmul.mubr.bf16.gmra.mxu0 %v494
        %v661 = vpop.f32.mrf.mxu0
        %v662 = vadd.f32 0.0, %v661
        %v663 = vpop.f32.mrf.mxu0
        %v664 = vpop.f32.mrf.mxu0
        %v665 = vadd.f32 0.0, %v664
        %v666 = vpop.f32.mrf.mxu0
        %667 = vmatprep.mubr.bf16.mxu0 0
        %668 = vmatmul.mubr.bf16.gmra.mxu0 %v495
        %v669 = vpop.f32.mrf.mxu0
        %v670 = vadd.f32 0.0, %v669
        %v671 = vpop.f32.mrf.mxu0
        %v672 = vpop.f32.mrf.mxu0
        %v673 = vadd.f32 0.0, %v672
        %v674 = vpop.f32.mrf.mxu0
        %675 = vmatprep.mubr.bf16.mxu0 0
        %676 = vmatmul.mubr.bf16.gmra.mxu0 %v496
        %v677 = vpop.f32.mrf.mxu0
        %v678 = vadd.f32 0.0, %v677
        %v679 = vpop.f32.mrf.mxu0
        %v680 = vpop.f32.mrf.mxu0
        %v681 = vadd.f32 0.0, %v680
        %v682 = vpop.f32.mrf.mxu0
        %683 = vmatprep.mubr.bf16.mxu0 0
        %684 = vmatmul.mubr.bf16.gmra.mxu0 %v497
        %v685 = vpop.f32.mrf.mxu0
        %v686 = vadd.f32 0.0, %v685
        %v687 = vpop.f32.mrf.mxu0
        %v688 = vpop.f32.mrf.mxu0
        %v689 = vadd.f32 0.0, %v688
        %v690 = vpop.f32.mrf.mxu0
        %691 = vmatprep.mubr.bf16.mxu0 0
        %692 = vmatmul.mubr.bf16.gmra.mxu0 %v498
        %v693 = vpop.f32.mrf.mxu0
        %v694 = vadd.f32 0.0, %v693
        %v695 = vpop.f32.mrf.mxu0
        %v696 = vpop.f32.mrf.mxu0
        %v697 = vadd.f32 0.0, %v696
        %v698 = vpop.f32.mrf.mxu0
        %699 = vmatprep.mubr.bf16.mxu0 0
        %700 = vmatmul.mubr.bf16.gmra.mxu0 %v499
        %v701 = vpop.f32.mrf.mxu0
        %v702 = vadd.f32 0.0, %v701
        %v703 = vpop.f32.mrf.mxu0
        %v704 = vpop.f32.mrf.mxu0
        %v705 = vadd.f32 0.0, %v704
        %v706 = vpop.f32.mrf.mxu0
        %707 = vmatprep.mubr.bf16.mxu0 0
        %708 = vmatmul.mubr.bf16.gmra.mxu0 %v500
        %v709 = vpop.f32.mrf.mxu0
        %v710 = vadd.f32 0.0, %v709
        %v711 = vpop.f32.mrf.mxu0
        %v712 = vpop.f32.mrf.mxu0
        %v713 = vadd.f32 0.0, %v712
        %v714 = vpop.f32.mrf.mxu0
        %715 = vmatprep.mubr.bf16.mxu0 0
        %716 = vmatmul.mubr.bf16.gmra.mxu0 %v501
        %v717 = vpop.f32.mrf.mxu0
        %v718 = vadd.f32 0.0, %v717
        %v719 = vpop.f32.mrf.mxu0
        %v720 = vpop.f32.mrf.mxu0
        %v721 = vadd.f32 0.0, %v720
        %v722 = vpop.f32.mrf.mxu0
        %723 = vmatprep.mubr.bf16.mxu0 0
        %724 = vmatmul.mubr.bf16.gmra.mxu0 %v502
        %v725 = vpop.f32.mrf.mxu0
        %v726 = vadd.f32 0.0, %v725
        %v727 = vpop.f32.mrf.mxu0
        %v728 = vpop.f32.mrf.mxu0
        %v729 = vadd.f32 0.0, %v728
        %v730 = vpop.f32.mrf.mxu0
        %731 = vmatprep.mubr.bf16.mxu0 0
        %732 = vmatmul.mubr.bf16.gmra.mxu0 %v503
        %v733 = vpop.f32.mrf.mxu0
        %v734 = vadd.f32 0.0, %v733
        %v735 = vpop.f32.mrf.mxu0
        %v736 = vpop.f32.mrf.mxu0
        %v737 = vadd.f32 0.0, %v736
        %v738 = vpop.f32.mrf.mxu0
        %739 = vmatprep.mubr.bf16.mxu0 0
        %740 = vmatmul.mubr.bf16.gmra.mxu0 %v504
        %v741 = vpop.f32.mrf.mxu0
        %v742 = vadd.f32 0.0, %v741
        %v743 = vpop.f32.mrf.mxu0
        %v744 = vpop.f32.mrf.mxu0
        %v745 = vadd.f32 0.0, %v744
        %v746 = vpop.f32.mrf.mxu0
        %747 = vmatprep.mubr.bf16.mxu0 0
        %748 = vmatmul.mubr.bf16.gmra.mxu0 %v505
        %v749 = vpop.f32.mrf.mxu0
        %v750 = vadd.f32 0.0, %v749
        %v751 = vpop.f32.mrf.mxu0
        %v752 = vpop.f32.mrf.mxu0
        %v753 = vadd.f32 0.0, %v752
        %v754 = vpop.f32.mrf.mxu0
        %755 = vmatprep.mubr.bf16.mxu0 0
        %756 = vmatmul.mubr.bf16.gmra.mxu0 %v506
        %v757 = vpop.f32.mrf.mxu0
        %v758 = vadd.f32 0.0, %v757
        %v759 = vpop.f32.mrf.mxu0
        %v760 = vpop.f32.mrf.mxu0
        %v761 = vadd.f32 0.0, %v760
        %v762 = vpop.f32.mrf.mxu0
        %763 = vmatprep.mubr.bf16.mxu0 0
        %764 = vmatmul.mubr.bf16.gmra.mxu0 %v507
        %v765 = vpop.f32.mrf.mxu0
        %v766 = vadd.f32 0.0, %v765
        %v767 = vpop.f32.mrf.mxu0
        %v768 = vpop.f32.mrf.mxu0
        %v769 = vadd.f32 0.0, %v768
        %v770 = vpop.f32.mrf.mxu0
        %771 = vmatprep.mubr.bf16.mxu0 0
        %772 = vmatmul.mubr.bf16.gmra.mxu0 %v508
        %v773 = vpop.f32.mrf.mxu0
        %v774 = vadd.f32 0.0, %v773
        %v775 = vpop.f32.mrf.mxu0
        %v776 = vpop.f32.mrf.mxu0
        %v777 = vadd.f32 0.0, %v776
        %v778 = vpop.f32.mrf.mxu0
        %779 = vmatprep.mubr.bf16.mxu0 0
        %780 = vmatmul.mubr.bf16.gmra.mxu0 %v509
        %v781 = vpop.f32.mrf.mxu0
        %v782 = vadd.f32 0.0, %v781
        %v783 = vpop.f32.mrf.mxu0
        %v784 = vpop.f32.mrf.mxu0
        %v785 = vadd.f32 0.0, %v784
        %v786 = vpop.f32.mrf.mxu0
        %787 = vmatprep.mubr.bf16.mxu0 0
        %788 = vmatmul.mubr.bf16.gmra.mxu0 %v510
        %v789 = vpop.f32.mrf.mxu0
        %v790 = vadd.f32 0.0, %v789
        %v791 = vpop.f32.mrf.mxu0
        %v792 = vpop.f32.mrf.mxu0
        %v793 = vadd.f32 0.0, %v792
        %v794 = vpop.f32.mrf.mxu0
        %795 = vmatprep.mubr.bf16.mxu0 0
        %796 = vmatmul.mubr.bf16.gmra.mxu0 %v511
        %v797 = vpop.f32.mrf.mxu0
        %v798 = vadd.f32 0.0, %v797
        %v799 = vpop.f32.mrf.mxu0
        %v800 = vpop.f32.mrf.mxu0
        %v801 = vadd.f32 0.0, %v800
        %v802 = vpop.f32.mrf.mxu0
        %803 = vmatprep.mubr.bf16.mxu0 0
        %804 = vmatmul.mubr.bf16.gmra.mxu0 %v512
        %v805 = vpop.f32.mrf.mxu0
        %v806 = vadd.f32 0.0, %v805
        %v807 = vpop.f32.mrf.mxu0
        %v808 = vpop.f32.mrf.mxu0
        %v809 = vadd.f32 0.0, %v808
        %v810 = vpop.f32.mrf.mxu0
        %811 = vmatprep.mubr.bf16.mxu0 0
        %812 = vmatmul.mubr.bf16.gmra.mxu0 %v513
        %v813 = vpop.f32.mrf.mxu0
        %v814 = vadd.f32 0.0, %v813
        %v815 = vpop.f32.mrf.mxu0
        %v816 = vpop.f32.mrf.mxu0
        %v817 = vadd.f32 0.0, %v816
        %v818 = vpop.f32.mrf.mxu0
        %819 = vmatprep.mubr.bf16.mxu0 0
        %820 = vmatmul.mubr.bf16.gmra.mxu0 %v514
        %v821 = vpop.f32.mrf.mxu0
        %v822 = vadd.f32 0.0, %v821
        %v823 = vpop.f32.mrf.mxu0
        %v824 = vpop.f32.mrf.mxu0
        %v825 = vadd.f32 0.0, %v824
        %v826 = vpop.f32.mrf.mxu0
        %827 = vmatprep.mubr.bf16.mxu0 0
        %828 = vmatmul.mubr.bf16.gmra.mxu0 %v515
        %v829 = vpop.f32.mrf.mxu0
        %v830 = vadd.f32 0.0, %v829
        %v831 = vpop.f32.mrf.mxu0
        %v832 = vpop.f32.mrf.mxu0
        %v833 = vadd.f32 0.0, %v832
        %v834 = vpop.f32.mrf.mxu0
        %835 = vmatprep.mubr.bf16.mxu0 0
        %836 = vmatmul.mubr.bf16.gmra.mxu0 %v516
        %v837 = vpop.f32.mrf.mxu0
        %v838 = vadd.f32 0.0, %v837
        %v839 = vpop.f32.mrf.mxu0
        %v840 = vpop.f32.mrf.mxu0
        %v841 = vadd.f32 0.0, %v840
        %v842 = vpop.f32.mrf.mxu0
        %843 = vmatprep.mubr.bf16.mxu0 0
        %844 = vmatmul.mubr.bf16.gmra.mxu0 %v517
        %v845 = vpop.f32.mrf.mxu0
        %v846 = vadd.f32 0.0, %v845
        %v847 = vpop.f32.mrf.mxu0
        %v848 = vpop.f32.mrf.mxu0
        %v849 = vadd.f32 0.0, %v848
        %v850 = vpop.f32.mrf.mxu0
        %851 = vmatprep.mubr.bf16.mxu0 0
        %852 = vmatmul.mubr.bf16.gmra.mxu0 %v518
        %v853 = vpop.f32.mrf.mxu0
        %v854 = vadd.f32 0.0, %v853
        %v855 = vpop.f32.mrf.mxu0
        %v856 = vpop.f32.mrf.mxu0
        %v857 = vadd.f32 0.0, %v856
        %v858 = vpop.f32.mrf.mxu0
        %859 = vmatprep.mubr.bf16.mxu0 0
        %860 = vmatmul.mubr.bf16.gmra.mxu0 %v519
        %v861 = vpop.f32.mrf.mxu0
        %v862 = vadd.f32 0.0, %v861
        %v863 = vpop.f32.mrf.mxu0
        %v864 = vpop.f32.mrf.mxu0
        %v865 = vadd.f32 0.0, %v864
        %v866 = vpop.f32.mrf.mxu0
        %867 = vmatprep.mubr.bf16.mxu0 0
        %868 = vmatmul.mubr.bf16.gmra.mxu0 %v520
        %v869 = vpop.f32.mrf.mxu0
        %v870 = vadd.f32 0.0, %v869
        %v871 = vpop.f32.mrf.mxu0
        %v872 = vpop.f32.mrf.mxu0
        %v873 = vadd.f32 0.0, %v872
        %v874 = vpop.f32.mrf.mxu0
        %875 = vmatprep.mubr.bf16.mxu0 0
        %876 = vmatmul.mubr.bf16.gmra.mxu0 %v521
        %v877 = vpop.f32.mrf.mxu0
        %v878 = vadd.f32 0.0, %v877
        %v879 = vpop.f32.mrf.mxu0
        %v880 = vpop.f32.mrf.mxu0
        %v881 = vadd.f32 0.0, %v880
        %v882 = vpop.f32.mrf.mxu0
        %883 = vmatprep.mubr.bf16.mxu0 0
        %884 = vmatmul.mubr.bf16.gmra.mxu0 %v522
        %v885 = vpop.f32.mrf.mxu0
        %v886 = vadd.f32 0.0, %v885
        %v887 = vpop.f32.mrf.mxu0
        %v888 = vpop.f32.mrf.mxu0
        %v889 = vadd.f32 0.0, %v888
        %v890 = vpop.f32.mrf.mxu0
        %891 = vdwg.mxu0
        %v892 = vld [vmem:[%s277] sm:$0x1]
        %v894 = vlaneseq
        %v895 = vshrl.u32 %v894, 7
        %v896 = vsub.s32 0, %v895
        %v897 = vrot.slane %v892, %v896
        %v899 = vmul.f32 %v638, %v897
        %v900 = vmul.f32 %v641, %v897
        %v901 = vmul.f32 %v646, %v897
        %v902 = vmul.f32 %v649, %v897
        %v903 = vmul.f32 %v654, %v897
        %v904 = vmul.f32 %v657, %v897
        %v905 = vmul.f32 %v662, %v897
        %v906 = vmul.f32 %v665, %v897
        %v907 = vmul.f32 %v670, %v897
        %v908 = vmul.f32 %v673, %v897
        %v909 = vmul.f32 %v678, %v897
        %v910 = vmul.f32 %v681, %v897
        %v911 = vmul.f32 %v686, %v897
        %v912 = vmul.f32 %v689, %v897
        %v913 = vmul.f32 %v694, %v897
        %v914 = vmul.f32 %v697, %v897
        %v915 = vmul.f32 %v702, %v897
        %v916 = vmul.f32 %v705, %v897
        %v917 = vmul.f32 %v710, %v897
        %v918 = vmul.f32 %v713, %v897
        %v919 = vmul.f32 %v718, %v897
        %v920 = vmul.f32 %v721, %v897
        %v921 = vmul.f32 %v726, %v897
        %v922 = vmul.f32 %v729, %v897
        %v923 = vmul.f32 %v734, %v897
        %v924 = vmul.f32 %v737, %v897
        %v925 = vmul.f32 %v742, %v897
        %v926 = vmul.f32 %v745, %v897
        %v927 = vmul.f32 %v750, %v897
        %v928 = vmul.f32 %v753, %v897
        %v929 = vmul.f32 %v758, %v897
        %v930 = vmul.f32 %v761, %v897
        %v931 = vmul.f32 %v766, %v897
        %v932 = vmul.f32 %v769, %v897
        %v933 = vmul.f32 %v774, %v897
        %v934 = vmul.f32 %v777, %v897
        %v935 = vmul.f32 %v782, %v897
        %v936 = vmul.f32 %v785, %v897
        %v937 = vmul.f32 %v790, %v897
        %v938 = vmul.f32 %v793, %v897
        %v939 = vmul.f32 %v798, %v897
        %v940 = vmul.f32 %v801, %v897
        %v941 = vmul.f32 %v806, %v897
        %v942 = vmul.f32 %v809, %v897
        %v943 = vmul.f32 %v814, %v897
        %v944 = vmul.f32 %v817, %v897
        %v945 = vmul.f32 %v822, %v897
        %v946 = vmul.f32 %v825, %v897
        %v947 = vmul.f32 %v830, %v897
        %v948 = vmul.f32 %v833, %v897
        %v949 = vmul.f32 %v838, %v897
        %v950 = vmul.f32 %v841, %v897
        %v951 = vmul.f32 %v846, %v897
        %v952 = vmul.f32 %v849, %v897
        %v953 = vmul.f32 %v854, %v897
        %v954 = vmul.f32 %v857, %v897
        %v955 = vmul.f32 %v862, %v897
        %v956 = vmul.f32 %v865, %v897
        %v957 = vmul.f32 %v870, %v897
        %v958 = vmul.f32 %v873, %v897
        %v959 = vmul.f32 %v878, %v897
        %v960 = vmul.f32 %v881, %v897
        %v961 = vmul.f32 %v886, %v897
        %v962 = vmul.f32 %v889, %v897
        %v963 = vld [vmem:[%s280] sm:$0x1]
        %v965 = vlaneseq
        %v966 = vshrl.u32 %v965, 7
        %v967 = vsub.s32 0, %v966
        %v968 = vrot.slane %v963, %v967
        %v970 = vadd.f32 %v899, %v968
        %v971 = vadd.f32 %v900, %v968
        %v972 = vadd.f32 %v901, %v968
        %v973 = vadd.f32 %v902, %v968
        %v974 = vadd.f32 %v903, %v968
        %v975 = vadd.f32 %v904, %v968
        %v976 = vadd.f32 %v905, %v968
        %v977 = vadd.f32 %v906, %v968
        %v978 = vadd.f32 %v907, %v968
        %v979 = vadd.f32 %v908, %v968
        %v980 = vadd.f32 %v909, %v968
        %v981 = vadd.f32 %v910, %v968
        %v982 = vadd.f32 %v911, %v968
        %v983 = vadd.f32 %v912, %v968
        %v984 = vadd.f32 %v913, %v968
        %v985 = vadd.f32 %v914, %v968
        %v986 = vadd.f32 %v915, %v968
        %v987 = vadd.f32 %v916, %v968
        %v988 = vadd.f32 %v917, %v968
        %v989 = vadd.f32 %v918, %v968
        %v990 = vadd.f32 %v919, %v968
        %v991 = vadd.f32 %v920, %v968
        %v992 = vadd.f32 %v921, %v968
        %v993 = vadd.f32 %v922, %v968
        %v994 = vadd.f32 %v923, %v968
        %v995 = vadd.f32 %v924, %v968
        %v996 = vadd.f32 %v925, %v968
        %v997 = vadd.f32 %v926, %v968
        %v998 = vadd.f32 %v927, %v968
        %v999 = vadd.f32 %v928, %v968
        %v1000 = vadd.f32 %v929, %v968
        %v1001 = vadd.f32 %v930, %v968
        %v1002 = vadd.f32 %v931, %v968
        %v1003 = vadd.f32 %v932, %v968
        %v1004 = vadd.f32 %v933, %v968
        %v1005 = vadd.f32 %v934, %v968
        %v1006 = vadd.f32 %v935, %v968
        %v1007 = vadd.f32 %v936, %v968
        %v1008 = vadd.f32 %v937, %v968
        %v1009 = vadd.f32 %v938, %v968
        %v1010 = vadd.f32 %v939, %v968
        %v1011 = vadd.f32 %v940, %v968
        %v1012 = vadd.f32 %v941, %v968
        %v1013 = vadd.f32 %v942, %v968
        %v1014 = vadd.f32 %v943, %v968
        %v1015 = vadd.f32 %v944, %v968
        %v1016 = vadd.f32 %v945, %v968
        %v1017 = vadd.f32 %v946, %v968
        %v1018 = vadd.f32 %v947, %v968
        %v1019 = vadd.f32 %v948, %v968
        %v1020 = vadd.f32 %v949, %v968
        %v1021 = vadd.f32 %v950, %v968
        %v1022 = vadd.f32 %v951, %v968
        %v1023 = vadd.f32 %v952, %v968
        %v1024 = vadd.f32 %v953, %v968
        %v1025 = vadd.f32 %v954, %v968
        %v1026 = vadd.f32 %v955, %v968
        %v1027 = vadd.f32 %v956, %v968
        %v1028 = vadd.f32 %v957, %v968
        %v1029 = vadd.f32 %v958, %v968
        %v1030 = vadd.f32 %v959, %v968
        %v1031 = vadd.f32 %v960, %v968
        %v1032 = vadd.f32 %v961, %v968
        %v1033 = vadd.f32 %v962, %v968
        %v1034 = vmax.f32 %v970, 0.0
        %v1035 = vmax.f32 %v971, 0.0
        %v1036 = vmax.f32 %v972, 0.0
        %v1037 = vmax.f32 %v973, 0.0
        %v1038 = vmax.f32 %v974, 0.0
        %v1039 = vmax.f32 %v975, 0.0
        %v1040 = vmax.f32 %v976, 0.0
        %v1041 = vmax.f32 %v977, 0.0
        %v1042 = vmax.f32 %v978, 0.0
        %v1043 = vmax.f32 %v979, 0.0
        %v1044 = vmax.f32 %v980, 0.0
        %v1045 = vmax.f32 %v981, 0.0
        %v1046 = vmax.f32 %v982, 0.0
        %v1047 = vmax.f32 %v983, 0.0
        %v1048 = vmax.f32 %v984, 0.0
        %v1049 = vmax.f32 %v985, 0.0
        %v1050 = vmax.f32 %v986, 0.0
        %v1051 = vmax.f32 %v987, 0.0
        %v1052 = vmax.f32 %v988, 0.0
        %v1053 = vmax.f32 %v989, 0.0
        %v1054 = vmax.f32 %v990, 0.0
        %v1055 = vmax.f32 %v991, 0.0
        %v1056 = vmax.f32 %v992, 0.0
        %v1057 = vmax.f32 %v993, 0.0
        %v1058 = vmax.f32 %v994, 0.0
        %v1059 = vmax.f32 %v995, 0.0
        %v1060 = vmax.f32 %v996, 0.0
        %v1061 = vmax.f32 %v997, 0.0
        %v1062 = vmax.f32 %v998, 0.0
        %v1063 = vmax.f32 %v999, 0.0
        %v1064 = vmax.f32 %v1000, 0.0
        %v1065 = vmax.f32 %v1001, 0.0
        %v1066 = vmax.f32 %v1002, 0.0
        %v1067 = vmax.f32 %v1003, 0.0
        %v1068 = vmax.f32 %v1004, 0.0
        %v1069 = vmax.f32 %v1005, 0.0
        %v1070 = vmax.f32 %v1006, 0.0
        %v1071 = vmax.f32 %v1007, 0.0
        %v1072 = vmax.f32 %v1008, 0.0
        %v1073 = vmax.f32 %v1009, 0.0
        %v1074 = vmax.f32 %v1010, 0.0
        %v1075 = vmax.f32 %v1011, 0.0
        %v1076 = vmax.f32 %v1012, 0.0
        %v1077 = vmax.f32 %v1013, 0.0
        %v1078 = vmax.f32 %v1014, 0.0
        %v1079 = vmax.f32 %v1015, 0.0
        %v1080 = vmax.f32 %v1016, 0.0
        %v1081 = vmax.f32 %v1017, 0.0
        %v1082 = vmax.f32 %v1018, 0.0
        %v1083 = vmax.f32 %v1019, 0.0
        %v1084 = vmax.f32 %v1020, 0.0
        %v1085 = vmax.f32 %v1021, 0.0
        %v1086 = vmax.f32 %v1022, 0.0
        %v1087 = vmax.f32 %v1023, 0.0
        %v1088 = vmax.f32 %v1024, 0.0
        %v1089 = vmax.f32 %v1025, 0.0
        %v1090 = vmax.f32 %v1026, 0.0
        %v1091 = vmax.f32 %v1027, 0.0
        %v1092 = vmax.f32 %v1028, 0.0
        %v1093 = vmax.f32 %v1029, 0.0
        %v1094 = vmax.f32 %v1030, 0.0
        %v1095 = vmax.f32 %v1031, 0.0
        %v1096 = vmax.f32 %v1032, 0.0
        %v1097 = vmax.f32 %v1033, 0.0
        %v1098 = vpack.c.bf16 %v1035, %v1034
        %v1099 = vpack.c.bf16 %v1037, %v1036
        %v1100 = vpack.c.bf16 %v1039, %v1038
        %v1101 = vpack.c.bf16 %v1041, %v1040
        %v1102 = vpack.c.bf16 %v1043, %v1042
        %v1103 = vpack.c.bf16 %v1045, %v1044
        %v1104 = vpack.c.bf16 %v1047, %v1046
        %v1105 = vpack.c.bf16 %v1049, %v1048
        %v1106 = vpack.c.bf16 %v1051, %v1050
        %v1107 = vpack.c.bf16 %v1053, %v1052
        %v1108 = vpack.c.bf16 %v1055, %v1054
        %v1109 = vpack.c.bf16 %v1057, %v1056
        %v1110 = vpack.c.bf16 %v1059, %v1058
        %v1111 = vpack.c.bf16 %v1061, %v1060
        %v1112 = vpack.c.bf16 %v1063, %v1062
        %v1113 = vpack.c.bf16 %v1065, %v1064
        %v1114 = vpack.c.bf16 %v1067, %v1066
        %v1115 = vpack.c.bf16 %v1069, %v1068
        %v1116 = vpack.c.bf16 %v1071, %v1070
        %v1117 = vpack.c.bf16 %v1073, %v1072
        %v1118 = vpack.c.bf16 %v1075, %v1074
        %v1119 = vpack.c.bf16 %v1077, %v1076
        %v1120 = vpack.c.bf16 %v1079, %v1078
        %v1121 = vpack.c.bf16 %v1081, %v1080
        %v1122 = vpack.c.bf16 %v1083, %v1082
        %v1123 = vpack.c.bf16 %v1085, %v1084
        %v1124 = vpack.c.bf16 %v1087, %v1086
        %v1125 = vpack.c.bf16 %v1089, %v1088
        %v1126 = vpack.c.bf16 %v1091, %v1090
        %v1127 = vpack.c.bf16 %v1093, %v1092
        %v1128 = vpack.c.bf16 %v1095, %v1094
        %v1129 = vpack.c.bf16 %v1097, %v1096
        %v1162 = vunpack.c.l.b16 %v1098
        %v1163 = vunpack.c.h.b16 %v1098
        %v1164 = vunpack.c.l.b16 %v1099
        %v1165 = vunpack.c.h.b16 %v1099
        %v1166 = vunpack.c.l.b16 %v1100
        %v1167 = vunpack.c.h.b16 %v1100
        %v1168 = vunpack.c.l.b16 %v1101
        %v1169 = vunpack.c.h.b16 %v1101
        %v1170 = vunpack.c.l.b16 %v1102
        %v1171 = vunpack.c.h.b16 %v1102
        %v1172 = vunpack.c.l.b16 %v1103
        %v1173 = vunpack.c.h.b16 %v1103
        %v1174 = vunpack.c.l.b16 %v1104
        %v1175 = vunpack.c.h.b16 %v1104
        %v1176 = vunpack.c.l.b16 %v1105
        %v1177 = vunpack.c.h.b16 %v1105
        %v1178 = vunpack.c.l.b16 %v1106
        %v1179 = vunpack.c.h.b16 %v1106
        %v1180 = vunpack.c.l.b16 %v1107
        %v1181 = vunpack.c.h.b16 %v1107
        %v1182 = vunpack.c.l.b16 %v1108
        %v1183 = vunpack.c.h.b16 %v1108
        %v1184 = vunpack.c.l.b16 %v1109
        %v1185 = vunpack.c.h.b16 %v1109
        %v1186 = vunpack.c.l.b16 %v1110
        %v1187 = vunpack.c.h.b16 %v1110
        %v1188 = vunpack.c.l.b16 %v1111
        %v1189 = vunpack.c.h.b16 %v1111
        %v1190 = vunpack.c.l.b16 %v1112
        %v1191 = vunpack.c.h.b16 %v1112
        %v1192 = vunpack.c.l.b16 %v1113
        %v1193 = vunpack.c.h.b16 %v1113
        %v1194 = vunpack.c.l.b16 %v1114
        %v1195 = vunpack.c.h.b16 %v1114
        %v1196 = vunpack.c.l.b16 %v1115
        %v1197 = vunpack.c.h.b16 %v1115
        %v1198 = vunpack.c.l.b16 %v1116
        %v1199 = vunpack.c.h.b16 %v1116
        %v1200 = vunpack.c.l.b16 %v1117
        %v1201 = vunpack.c.h.b16 %v1117
        %v1202 = vunpack.c.l.b16 %v1118
        %v1203 = vunpack.c.h.b16 %v1118
        %v1204 = vunpack.c.l.b16 %v1119
        %v1205 = vunpack.c.h.b16 %v1119
        %v1206 = vunpack.c.l.b16 %v1120
        %v1207 = vunpack.c.h.b16 %v1120
        %v1208 = vunpack.c.l.b16 %v1121
        %v1209 = vunpack.c.h.b16 %v1121
        %v1210 = vunpack.c.l.b16 %v1122
        %v1211 = vunpack.c.h.b16 %v1122
        %v1212 = vunpack.c.l.b16 %v1123
        %v1213 = vunpack.c.h.b16 %v1123
        %v1214 = vunpack.c.l.b16 %v1124
        %v1215 = vunpack.c.h.b16 %v1124
        %v1216 = vunpack.c.l.b16 %v1125
        %v1217 = vunpack.c.h.b16 %v1125
        %v1218 = vunpack.c.l.b16 %v1126
        %v1219 = vunpack.c.h.b16 %v1126
        %v1220 = vunpack.c.l.b16 %v1127
        %v1221 = vunpack.c.h.b16 %v1127
        %v1222 = vunpack.c.l.b16 %v1128
        %v1223 = vunpack.c.h.b16 %v1128
        %v1224 = vunpack.c.l.b16 %v1129
        %v1225 = vunpack.c.h.b16 %v1129
        %v1226 = vpack.c.b16 %v1162, %v1162
        %v1227 = vpack.c.b16 %v1163, %v1163
        %v1228 = vpack.c.b16 %v1164, %v1164
        %v1229 = vpack.c.b16 %v1165, %v1165
        %v1230 = vpack.c.b16 %v1166, %v1166
        %v1231 = vpack.c.b16 %v1167, %v1167
        %v1232 = vpack.c.b16 %v1168, %v1168
        %v1233 = vpack.c.b16 %v1169, %v1169
        %v1234 = vpack.c.b16 %v1170, %v1170
        %v1235 = vpack.c.b16 %v1171, %v1171
        %v1236 = vpack.c.b16 %v1172, %v1172
        %v1237 = vpack.c.b16 %v1173, %v1173
        %v1238 = vpack.c.b16 %v1174, %v1174
        %v1239 = vpack.c.b16 %v1175, %v1175
        %v1240 = vpack.c.b16 %v1176, %v1176
        %v1241 = vpack.c.b16 %v1177, %v1177
        %v1242 = vpack.c.b16 %v1178, %v1178
        %v1243 = vpack.c.b16 %v1179, %v1179
        %v1244 = vpack.c.b16 %v1180, %v1180
        %v1245 = vpack.c.b16 %v1181, %v1181
        %v1246 = vpack.c.b16 %v1182, %v1182
        %v1247 = vpack.c.b16 %v1183, %v1183
        %v1248 = vpack.c.b16 %v1184, %v1184
        %v1249 = vpack.c.b16 %v1185, %v1185
        %v1250 = vpack.c.b16 %v1186, %v1186
        %v1251 = vpack.c.b16 %v1187, %v1187
        %v1252 = vpack.c.b16 %v1188, %v1188
        %v1253 = vpack.c.b16 %v1189, %v1189
        %v1254 = vpack.c.b16 %v1190, %v1190
        %v1255 = vpack.c.b16 %v1191, %v1191
        %v1256 = vpack.c.b16 %v1192, %v1192
        %v1257 = vpack.c.b16 %v1193, %v1193
        %v1258 = vpack.c.b16 %v1194, %v1194
        %v1259 = vpack.c.b16 %v1195, %v1195
        %v1260 = vpack.c.b16 %v1196, %v1196
        %v1261 = vpack.c.b16 %v1197, %v1197
        %v1262 = vpack.c.b16 %v1198, %v1198
        %v1263 = vpack.c.b16 %v1199, %v1199
        %v1264 = vpack.c.b16 %v1200, %v1200
        %v1265 = vpack.c.b16 %v1201, %v1201
        %v1266 = vpack.c.b16 %v1202, %v1202
        %v1267 = vpack.c.b16 %v1203, %v1203
        %v1268 = vpack.c.b16 %v1204, %v1204
        %v1269 = vpack.c.b16 %v1205, %v1205
        %v1270 = vpack.c.b16 %v1206, %v1206
        %v1271 = vpack.c.b16 %v1207, %v1207
        %v1272 = vpack.c.b16 %v1208, %v1208
        %v1273 = vpack.c.b16 %v1209, %v1209
        %v1274 = vpack.c.b16 %v1210, %v1210
        %v1275 = vpack.c.b16 %v1211, %v1211
        %v1276 = vpack.c.b16 %v1212, %v1212
        %v1277 = vpack.c.b16 %v1213, %v1213
        %v1278 = vpack.c.b16 %v1214, %v1214
        %v1279 = vpack.c.b16 %v1215, %v1215
        %v1280 = vpack.c.b16 %v1216, %v1216
        %v1281 = vpack.c.b16 %v1217, %v1217
        %v1282 = vpack.c.b16 %v1218, %v1218
        %v1283 = vpack.c.b16 %v1219, %v1219
        %v1284 = vpack.c.b16 %v1220, %v1220
        %v1285 = vpack.c.b16 %v1221, %v1221
        %v1286 = vpack.c.b16 %v1222, %v1222
        %v1287 = vpack.c.b16 %v1223, %v1223
        %v1288 = vpack.c.b16 %v1224, %v1224
        %v1289 = vpack.c.b16 %v1225, %v1225
        %1354 = vst [vmem:[%s273] sm:$0xf] %v1226
        %1355 = vst [vmem:[%s273 + $0x4] sm:$0xf] %v1227
        %1356 = vst [vmem:[%s273 + $0x8] sm:$0xf] %v1228
        %1357 = vst [vmem:[%s273 + $0xc] sm:$0xf] %v1229
        %1358 = vst [vmem:[%s273 + $0x10] sm:$0xf] %v1230
        %1359 = vst [vmem:[%s273 + $0x14] sm:$0xf] %v1231
        %1360 = vst [vmem:[%s273 + $0x18] sm:$0xf] %v1232
        %1361 = vst [vmem:[%s273 + $0x1c] sm:$0xf] %v1233
        %1362 = vst [vmem:[%s273 + $0x20] sm:$0xf] %v1234
        %1363 = vst [vmem:[%s273 + $0x24] sm:$0xf] %v1235
        %1364 = vst [vmem:[%s273 + $0x28] sm:$0xf] %v1236
        %1365 = vst [vmem:[%s273 + $0x2c] sm:$0xf] %v1237
        %1366 = vst [vmem:[%s273 + $0x30] sm:$0xf] %v1238
        %1367 = vst [vmem:[%s273 + $0x34] sm:$0xf] %v1239
        %1368 = vst [vmem:[%s273 + $0x38] sm:$0xf] %v1240
        %1369 = vst [vmem:[%s273 + $0x3c] sm:$0xf] %v1241
        %1370 = vst [vmem:[%s273 + $0x40] sm:$0xf] %v1242
        %1371 = vst [vmem:[%s273 + $0x44] sm:$0xf] %v1243
        %1372 = vst [vmem:[%s273 + $0x48] sm:$0xf] %v1244
        %1373 = vst [vmem:[%s273 + $0x4c] sm:$0xf] %v1245
        %1374 = vst [vmem:[%s273 + $0x50] sm:$0xf] %v1246
        %1375 = vst [vmem:[%s273 + $0x54] sm:$0xf] %v1247
        %1376 = vst [vmem:[%s273 + $0x58] sm:$0xf] %v1248
        %1377 = vst [vmem:[%s273 + $0x5c] sm:$0xf] %v1249
        %1378 = vst [vmem:[%s273 + $0x60] sm:$0xf] %v1250
        %1379 = vst [vmem:[%s273 + $0x64] sm:$0xf] %v1251
        %1380 = vst [vmem:[%s273 + $0x68] sm:$0xf] %v1252
        %1381 = vst [vmem:[%s273 + $0x6c] sm:$0xf] %v1253
        %1382 = vst [vmem:[%s273 + $0x70] sm:$0xf] %v1254
        %1383 = vst [vmem:[%s273 + $0x74] sm:$0xf] %v1255
        %1384 = vst [vmem:[%s273 + $0x78] sm:$0xf] %v1256
        %1385 = vst [vmem:[%s273 + $0x7c] sm:$0xf] %v1257
        %1386 = vst [vmem:[%s273 + $0x80] sm:$0xf] %v1258
        %1387 = vst [vmem:[%s273 + $0x84] sm:$0xf] %v1259
        %1388 = vst [vmem:[%s273 + $0x88] sm:$0xf] %v1260
        %1389 = vst [vmem:[%s273 + $0x8c] sm:$0xf] %v1261
        %1390 = vst [vmem:[%s273 + $0x90] sm:$0xf] %v1262
        %1391 = vst [vmem:[%s273 + $0x94] sm:$0xf] %v1263
        %1392 = vst [vmem:[%s273 + $0x98] sm:$0xf] %v1264
        %1393 = vst [vmem:[%s273 + $0x9c] sm:$0xf] %v1265
        %1394 = vst [vmem:[%s273 + $0xa0] sm:$0xf] %v1266
        %1395 = vst [vmem:[%s273 + $0xa4] sm:$0xf] %v1267
        %1396 = vst [vmem:[%s273 + $0xa8] sm:$0xf] %v1268
        %1397 = vst [vmem:[%s273 + $0xac] sm:$0xf] %v1269
        %1398 = vst [vmem:[%s273 + $0xb0] sm:$0xf] %v1270
        %1399 = vst [vmem:[%s273 + $0xb4] sm:$0xf] %v1271
        %1400 = vst [vmem:[%s273 + $0xb8] sm:$0xf] %v1272
        %1401 = vst [vmem:[%s273 + $0xbc] sm:$0xf] %v1273
        %1402 = vst [vmem:[%s273 + $0xc0] sm:$0xf] %v1274
        %1403 = vst [vmem:[%s273 + $0xc4] sm:$0xf] %v1275
        %1404 = vst [vmem:[%s273 + $0xc8] sm:$0xf] %v1276
        %1405 = vst [vmem:[%s273 + $0xcc] sm:$0xf] %v1277
        %1406 = vst [vmem:[%s273 + $0xd0] sm:$0xf] %v1278
        %1407 = vst [vmem:[%s273 + $0xd4] sm:$0xf] %v1279
        %1408 = vst [vmem:[%s273 + $0xd8] sm:$0xf] %v1280
        %1409 = vst [vmem:[%s273 + $0xdc] sm:$0xf] %v1281
        %1410 = vst [vmem:[%s273 + $0xe0] sm:$0xf] %v1282
        %1411 = vst [vmem:[%s273 + $0xe4] sm:$0xf] %v1283
        %1412 = vst [vmem:[%s273 + $0xe8] sm:$0xf] %v1284
        %1413 = vst [vmem:[%s273 + $0xec] sm:$0xf] %v1285
        %1414 = vst [vmem:[%s273 + $0xf0] sm:$0xf] %v1286
        %1415 = vst [vmem:[%s273 + $0xf4] sm:$0xf] %v1287
        %1416 = vst [vmem:[%s273 + $0xf8] sm:$0xf] %v1288
        %1417 = vst [vmem:[%s273 + $0xfc] sm:$0xf] %v1289
        %s1418 = sand.u32 %s148, 1
        %s1419 = scalar_lea.sflag [#allocation4], %s1418
        %s1420 = sand.u32 %s148, 1
        %s1421 = smul.addr %s1420, 256
        %s1422 = scalar_lea.vmem [#allocation7], %s1421
        // Predicated region
        $region45: #{tpu_custom_call.1} parent=35 // pred_check
          %p1423 = pneg %p158
        $region46: #{tpu_custom_call.1} parent=35 // pred_check_branch
          %1425 = sbr.rel (%p1423) target = $region48
        $region47: #{tpu_custom_call.1} parent=35 // pred_region
          %s1426 = smul.u32 64, %s26
          %s1428 = ssub.s32 4096, 4096
          %1429 = vsyncadd %s1419, %s1428
          %s1430 = sadd.s32 %s27, %s1426
          %s1431 = smul.addr %s1430, 64
          %s1432 = scalar_lea.hbm %s4, %s1431
          %s1433 = sshll.u32 %s1422, 4
          %s1434 = int_to_ptr.vmem [resolvable:$true] %s1433
          %1439 = dma.vmem_to_hbm [thread:$0]  %s1434, 4096, %s1432, %s1419, 64, 64, 4
        $region48: #{tpu_custom_call.1} parent=35 // pred_fallthru
          _
      $region36: #{tpu_custom_call.1} parent=5 // pred_fallthru
        _
      %p1440 = scmp.le.s32.totalorder 2, %s17
      // Predicated region
      $region49: #{tpu_custom_call.1} parent=5 // pred_check
        %p1441 = pneg %p1440
      $region50: #{tpu_custom_call.1} parent=5 // pred_check_branch
        %1443 = sbr.rel (%p1441) target = $region52
      $region51: #{tpu_custom_call.1} parent=5 // pred_region
        %s1444 = ssub.s32 %s17, 2
        // Predicated region
        $region53: #{tpu_custom_call.1} parent=51 // pred_check
          %p1445 = pneg %p164
        $region54: #{tpu_custom_call.1} parent=51 // pred_check_branch
          %1447 = sbr.rel (%p1445) target = $region56
        $region55: #{tpu_custom_call.1} parent=51 // pred_region
          %s1448 = sand.u32 %s149, 1
          %s1449 = scalar_lea.sflag [#allocation4], %s1448
          %s1450 = sand.u32 %s149, 1
          %s1451 = smul.addr %s1450, 256
          %s1452 = scalar_lea.vmem [#allocation7], %s1451
          %1453 = dma.done %s1449, 4096
        $region56: #{tpu_custom_call.1} parent=51 // pred_fallthru
          _
      $region52: #{tpu_custom_call.1} parent=5 // pred_fallthru
        _
    $region6: #{tpu_custom_call.1} parent=1 // loop_footer
      %s21 = sadd.s32 1, %s17
    $region7: #{tpu_custom_call.1} parent=1 // loop_footer_branch
      %16 = sbr.rel target = $region3
    $region8: #{tpu_custom_call.1} parent=1 // loop_exit
      _
    %1454 = vsyncpa [#allocation3], 1
    %s1455 = scalar_lea.sflag [#allocation3], 1
    %1456 = vsyncpa %s1455, 1
    %1457 = vsyncpa [#allocation6], 1
    %1458 = vsyncpa [#allocation4], 1
    %s1459 = scalar_lea.sflag [#allocation4], 1
    %1460 = vsyncpa %s1459, 1

</llo_original>
